<compile_context>
chip_gen: v5e
topology: v5e:2x2
jax: 0.10.0
libtpu: 0.0.40
codegen_flags: <defaults>
</compile_context>

<pallas_src>
import functools

import jax
import jax.numpy as jnp
import numpy as np
from jax.experimental import pallas as pl
from jax.experimental.pallas import tpu as pltpu

_NEG_BIG = -1e9  # padded-step penalty: drives i/f/o gates to exactly 0


def _mlstm_kernel(ff_ref,    # (T, Bt, D+1) bf16  time-major feats + penalty channel
                  fb_ref,    # (T, Bt, D+1) bf16  time-reversed copy (backward direction)
                  wih_ref,   # (2, D+1, 4H) bf16  gate cols [i,f,o,g]; last row = ones (penalty)
                  bias_ref,  # (2, 1, 4H)   f32
                  whh_ref,   # (2H, 4H)     bf16  [Whh_f ; Whh_b], gate cols [i,f,o,g]
                  out_ref,   # (T, Bt, 2H)  f32   [..., :H]=fwd, [..., H:]=bwd
                  gx_ref,    # (T, 2Bt, 4H) f32   scratch; rows [Bt:] already time-reversed
                  *, unroll):
    T, Bt, H2 = out_ref.shape
    H = H2 // 2
    D1 = ff_ref.shape[-1]

    # ---- hoisted input projection (+bias, +pad penalty) written in the consumed layout ----
    gx_f = jnp.dot(ff_ref[...].reshape(T * Bt, D1), wih_ref[0],
                   preferred_element_type=jnp.float32) + bias_ref[0]          # (T*Bt, 4H)
    gx_b = jnp.dot(fb_ref[...].reshape(T * Bt, D1), wih_ref[1],
                   preferred_element_type=jnp.float32) + bias_ref[1]          # (T*Bt, 4H)
    gx_ref[:, :Bt, :] = gx_f.reshape(T, Bt, 4 * H)        # fwd gates at time s
    gx_ref[:, Bt:, :] = gx_b.reshape(T, Bt, 4 * H)        # bwd gates at time T-1-s

    whh = whh_ref[...]                                    # loop-invariant (2H, 4H) bf16

    # block-diagonal carry selector, built in-kernel (no HBM operand)
    row = jax.lax.broadcasted_iota(jnp.int32, (2 * Bt, 2 * H), 0)
    col = jax.lax.broadcasted_iota(jnp.int32, (2 * Bt, 2 * H), 1)
    a = (row < Bt).astype(jnp.float32)
    b = (col < H).astype(jnp.float32)
    blk = (1.0 - jnp.abs(a - b)).astype(jnp.bfloat16)     # 1 on the two diagonal blocks

    def step(s, carry):
        hblk, c = carry                                   # (2Bt, 2H) bf16, (2Bt, H) f32
        # single dense per-step load: fwd rows at time s, bwd rows at time T-1-s
        gates = gx_ref[s] + jnp.dot(hblk, whh, preferred_element_type=jnp.float32)  # (2Bt, 4H)

        # gate cols [i, f, o, g]: sigmoid(x) = 0.5*(1+tanh(x/2)) -> one EUP op per vreg
        sig = 0.5 * (jnp.tanh(0.5 * gates[:, :3 * H]) + 1.0)
        g = jnp.tanh(gates[:, 3 * H:])
        i = sig[:, 0 * H:1 * H]
        f = sig[:, 1 * H:2 * H]
        o = sig[:, 2 * H:3 * H]

        c_new = f * c + i * g                             # f32 elementwise (v5e-safe)
        h_new = o * jnp.tanh(c_new)

        out_ref[s, :, 0:H] = h_new[:Bt]                   # forward half, time s
        out_ref[T - 1 - s, :, H:2 * H] = h_new[Bt:]       # backward half, time T-1-s

        h_bf = h_new.astype(jnp.bfloat16)                 # bf16 carry: no cast inside the dot
        hblk_new = jnp.concatenate([h_bf, h_bf], axis=1) * blk
        return hblk_new, c_new

    init = (jnp.zeros((2 * Bt, 2 * H), jnp.bfloat16),
            jnp.zeros((2 * Bt, H), jnp.float32))
    jax.lax.fori_loop(0, T, step, init, unroll=unroll)


def _reorder_gates(w):
    """PyTorch gate order [i, f, g, o] on the last axis -> kernel order [i, f, o, g]."""
    H = w.shape[-1] // 4
    return jnp.concatenate([w[..., :2 * H], w[..., 3 * H:], w[..., 2 * H:3 * H]], axis=-1)


def init_params(key, input_size, hidden):
    """Orthogonal 2-D weights (init_ortho), PyTorch-default uniform biases."""
    ortho = jax.nn.initializers.orthogonal()
    k = jax.random.split(key, 8)
    bound = 1.0 / np.sqrt(hidden)

    def bias(k_):
        return jax.random.uniform(k_, (4 * hidden,), jnp.float32, -bound, bound)

    p = {}
    # PyTorch stores weight_ih (4H, in), weight_hh (4H, H); keep transposed for x @ W.
    p['wih_f'] = ortho(k[0], (4 * hidden, input_size), jnp.float32).T
    p['whh_f'] = ortho(k[1], (4 * hidden, hidden), jnp.float32).T
    p['b_f'] = (bias(k[2]) + bias(k[3])).reshape(1, 4 * hidden)
    p['wih_b'] = ortho(k[4], (4 * hidden, input_size), jnp.float32).T
    p['whh_b'] = ortho(k[5], (4 * hidden, hidden), jnp.float32).T
    p['b_b'] = (bias(k[6]) + bias(k[7])).reshape(1, 4 * hidden)
    return p


def mlstm_forward(feats, seq_lengths, params, max_len=None, b_tile=None):
    """feats: (B, T, D) batch-first; seq_lengths: (B,). Returns (B, max_len or T, 2H)."""
    B, T, D = feats.shape
    H = params['whh_f'].shape[0]

    Bt = B if b_tile is None else int(b_tile)
    assert B % Bt == 0 and (Bt % 8 == 0 or Bt == B), "batch tile must divide B, sublane-aligned"
    nb = B // Bt

    # ---- weights: stack directions, reorder gate columns, append penalty row (ones) ----
    ones_row = jnp.ones((1, 4 * H), jnp.float32)
    wih = jnp.stack([jnp.concatenate([_reorder_gates(params['wih_f']), ones_row], axis=0),
                     jnp.concatenate([_reorder_gates(params['wih_b']), ones_row], axis=0)]
                    ).astype(jnp.bfloat16)                                      # (2, D+1, 4H)
    bias = jnp.stack([_reorder_gates(params['b_f']),
                      _reorder_gates(params['b_b'])]).astype(jnp.float32)       # (2, 1, 4H)
    whh = jnp.concatenate([_reorder_gates(params['whh_f']),
                           _reorder_gates(params['whh_b'])], axis=0).astype(jnp.bfloat16)  # (2H, 4H)

    # ---- time-major feats + padded-step penalty channel (i/f/o -> exactly 0 when t>=len) ----
    lens = seq_lengths.astype(jnp.int32)
    t_idx = jnp.arange(T, dtype=jnp.int32)
    pen = jnp.where(t_idx[:, None] < lens[None, :], 0.0, _NEG_BIG)              # (T, B)
    feats_tm = jnp.transpose(feats, (1, 0, 2)).astype(jnp.float32)              # (T, B, D)
    feats_aug = jnp.concatenate([feats_tm, pen[:, :, None]], axis=-1)           # (T, B, D+1)
    feats_f = feats_aug.astype(jnp.bfloat16)
    feats_b = feats_f[::-1]                      # time-reversed copy for the backward direction
    D1 = D + 1

    # ---- VMEM budget: double-buffered blocks + gx scratch + headroom ----
    def nbytes(shape, dt):
        return int(np.prod(shape)) * np.dtype(dt).itemsize
    vmem_need = (2 * (2 * nbytes((T, Bt, D1), jnp.bfloat16)
                      + nbytes((2, D1, 4 * H), jnp.bfloat16)
                      + nbytes((2, 1, 4 * H), jnp.float32)
                      + nbytes((2 * H, 4 * H), jnp.bfloat16)
                      + nbytes((T, Bt, 2 * H), jnp.float32))
                 + nbytes((T, 2 * Bt, 4 * H), jnp.float32)) + (8 << 20)
    vmem_limit = int(max(vmem_need, 32 << 20))

    kernel = functools.partial(_mlstm_kernel, unroll=(T if T <= 32 else 8))

    out_tbd = pl.pallas_call(
        kernel,
        out_shape=jax.ShapeDtypeStruct((T, B, 2 * H), jnp.float32),
        grid=(nb,),
        in_specs=[
            pl.BlockSpec((T, Bt, D1), lambda b: (0, b, 0)),       # feats fwd
            pl.BlockSpec((T, Bt, D1), lambda b: (0, b, 0)),       # feats bwd (time-reversed)
            pl.BlockSpec((2, D1, 4 * H), lambda b: (0, 0, 0)),    # Wih (both dirs)
            pl.BlockSpec((2, 1, 4 * H), lambda b: (0, 0, 0)),     # bias (both dirs)
            pl.BlockSpec((2 * H, 4 * H), lambda b: (0, 0)),       # Whh (stacked)
        ],
        out_specs=pl.BlockSpec((T, Bt, 2 * H), lambda b: (0, b, 0)),
        scratch_shapes=[pltpu.VMEM((T, 2 * Bt, 4 * H), jnp.float32)],
        compiler_params=pltpu.CompilerParams(
            dimension_semantics=("parallel",),
            vmem_limit_bytes=vmem_limit),
    )(feats_f, feats_b, wih, bias, whh)

    out = jnp.transpose(out_tbd, (1, 0, 2))          # (B, T, 2H) batch-first
    if max_len is not None:                          # pad_packed_sequence truncation
        out = out[:, :max_len, :]                    # max_len must be a static int
    return out


def _bf16(x):
    return np.asarray(jnp.asarray(np.asarray(x, np.float32)).astype(jnp.bfloat16)
                      .astype(jnp.float32))


def _ref_forward(feats, seq_lengths, params, max_len):
    """Pure-numpy packed-biLSTM reference (matmul inputs rounded to bf16 like the kernel)."""
    feats = np.asarray(feats, np.float32)
    lens = np.asarray(seq_lengths)
    B, T, D = feats.shape
    H = np.asarray(params['whh_f']).shape[0]
    feats_b = _bf16(feats)

    def sigmoid(z):
        return 1.0 / (1.0 + np.exp(-z))

    def run(Wih, Whh, b, reverse):
        Wih = _bf16(Wih)
        Whh = _bf16(Whh)
        b = np.asarray(b, np.float32).reshape(-1)
        out = np.zeros((B, T, H), np.float32)
        for bi in range(B):
            h = np.zeros(H, np.float32)
            c = np.zeros(H, np.float32)
            ts = range(int(lens[bi]) - 1, -1, -1) if reverse else range(int(lens[bi]))
            for t in ts:
                g = feats_b[bi, t] @ Wih + _bf16(h) @ Whh + b
                i = sigmoid(g[0:H]); f = sigmoid(g[H:2 * H])
                gg = np.tanh(g[2 * H:3 * H]); o = sigmoid(g[3 * H:4 * H])
                c = f * c + i * gg
                h = o * np.tanh(c)
                out[bi, t] = h
        return out

    out_f = run(params['wih_f'], params['whh_f'], params['b_f'], False)
    out_b = run(params['wih_b'], params['whh_b'], params['b_b'], True)
    out = np.concatenate([out_f, out_b], axis=-1)
    return out[:, :max_len, :]


if __name__ == "__main__":
    class Config:
        pass

    cfg = Config()
    cfg.embed_dim = 24
    cfg.mask_dim = 8
    cfg.l_hidden_size = 64
    cfg.l_num_layers = 2      # -> one bidirectional LSTM layer
    cfg.l_dropout = 0.0       # no-op with a single layer / at inference

    # TODO(synk): only a single stacked (bi)LSTM layer implemented (l_num_layers == 2).
    input_size = cfg.embed_dim + cfg.mask_dim          # 32
    hidden = cfg.l_hidden_size // 2                    # 32

    key = jax.random.PRNGKey(0)
    kp, kx = jax.random.split(key)
    params = init_params(kp, input_size, hidden)

    B, T = 8, 8
    feats = jax.random.normal(kx, (B, T, input_size), jnp.float32)
    # pack_padded_sequence wants lengths sorted descending (enforce_sorted=True)
    lens_py = [7, 7, 6, 5, 4, 3, 2, 1]
    seq_lengths = jnp.array(lens_py, jnp.int32)
    max_len = max(lens_py)                             # static Python int -> jit friendly

    fwd = jax.jit(mlstm_forward, static_argnames=("max_len", "b_tile"))
    out = fwd(feats, seq_lengths, params, max_len=max_len)
    out = jax.block_until_ready(out)

    ref = _ref_forward(feats, seq_lengths, params, max_len)
    assert out.shape == ref.shape, (out.shape, ref.shape)
    np.testing.assert_allclose(np.asarray(out), ref, atol=2e-3, rtol=2e-3)
    print("KERNEL_OK")
</pallas_src>

<mosaic_0001>
module attributes {stable_mosaic.version = 11 : i64} {
  func.func @_mlstm_kernel(%arg0: i32, %arg1: memref<8x8x33xbf16, #tpu.memory_space<vmem>>, %arg2: memref<8x8x33xbf16, #tpu.memory_space<vmem>>, %arg3: memref<2x33x128xbf16, #tpu.memory_space<vmem>>, %arg4: memref<2x1x128xf32, #tpu.memory_space<vmem>>, %arg5: memref<64x128xbf16, #tpu.memory_space<vmem>>, %arg6: memref<8x8x64xf32, #tpu.memory_space<vmem>>, %arg7: memref<8x16x128xf32, #tpu.memory_space<vmem>>) attributes {dimension_semantics = [#tpu.dimension_semantics<parallel>], iteration_bounds = array<i64: 1>, scalar_prefetch = 0 : i64, scratch_operands = 1 : i64, tpu.core_type = #tpu.core_type<tc>, window_params = [{transform_indices = @transform_0, window_bounds = array<i64: 8, 8, 33>}, {transform_indices = @transform_1, window_bounds = array<i64: 8, 8, 33>}, {pipeline_mode = #tpu.pipeline_mode<synchronous>, transform_indices = @transform_2, window_bounds = array<i64: 2, 33, 128>}, {pipeline_mode = #tpu.pipeline_mode<synchronous>, transform_indices = @transform_3, window_bounds = array<i64: 2, 1, 128>}, {pipeline_mode = #tpu.pipeline_mode<synchronous>, transform_indices = @transform_4, window_bounds = array<i64: 64, 128>}, {transform_indices = @transform_5, window_bounds = array<i64: 8, 8, 64>}]} {
    %c0 = arith.constant 0 : index
    %c0_0 = arith.constant 0 : index
    %c0_1 = arith.constant 0 : index
    %0 = vector.load %arg1[%c0, %c0_0, %c0_1] : memref<8x8x33xbf16, #tpu.memory_space<vmem>>, vector<8x8x33xbf16>
    %1 = vector.shape_cast %0 : vector<8x8x33xbf16> to vector<64x33xbf16>
    %c0_2 = arith.constant 0 : index
    %c0_3 = arith.constant 0 : index
    %c0_4 = arith.constant 0 : index
    %2 = vector.load %arg3[%c0_2, %c0_3, %c0_4] : memref<2x33x128xbf16, #tpu.memory_space<vmem>>, vector<1x33x128xbf16>
    %3 = vector.shape_cast %2 : vector<1x33x128xbf16> to vector<33x128xbf16>
    %cst = arith.constant dense<0.000000e+00> : vector<64x128xf32>
    %4 = tpu.matmul %1, %3, %cst {dimension_numbers = #tpu.dot_dimension_numbers<[1], [0], [0], [1], [0, 0, 1, 1], [], []>} : vector<64x33xbf16>, vector<33x128xbf16>, vector<64x128xf32> -> vector<64x128xf32>
    %c0_5 = arith.constant 0 : index
    %c0_6 = arith.constant 0 : index
    %c0_7 = arith.constant 0 : index
    %5 = vector.load %arg4[%c0_5, %c0_6, %c0_7] : memref<2x1x128xf32, #tpu.memory_space<vmem>>, vector<1x1x128xf32>
    %6 = vector.shape_cast %5 : vector<1x1x128xf32> to vector<1x128xf32>
    %7 = vector.broadcast %6 : vector<1x128xf32> to vector<64x128xf32>
    %8 = arith.addf %4, %7 : vector<64x128xf32>
    %c0_8 = arith.constant 0 : index
    %c0_9 = arith.constant 0 : index
    %c0_10 = arith.constant 0 : index
    %9 = vector.load %arg2[%c0_8, %c0_9, %c0_10] : memref<8x8x33xbf16, #tpu.memory_space<vmem>>, vector<8x8x33xbf16>
    %10 = vector.shape_cast %9 : vector<8x8x33xbf16> to vector<64x33xbf16>
    %c1 = arith.constant 1 : index
    %c0_11 = arith.constant 0 : index
    %c0_12 = arith.constant 0 : index
    %11 = vector.load %arg3[%c1, %c0_11, %c0_12] : memref<2x33x128xbf16, #tpu.memory_space<vmem>>, vector<1x33x128xbf16>
    %12 = vector.shape_cast %11 : vector<1x33x128xbf16> to vector<33x128xbf16>
    %cst_13 = arith.constant dense<0.000000e+00> : vector<64x128xf32>
    %13 = tpu.matmul %10, %12, %cst_13 {dimension_numbers = #tpu.dot_dimension_numbers<[1], [0], [0], [1], [0, 0, 1, 1], [], []>} : vector<64x33xbf16>, vector<33x128xbf16>, vector<64x128xf32> -> vector<64x128xf32>
    %c1_14 = arith.constant 1 : index
    %c0_15 = arith.constant 0 : index
    %c0_16 = arith.constant 0 : index
    %14 = vector.load %arg4[%c1_14, %c0_15, %c0_16] : memref<2x1x128xf32, #tpu.memory_space<vmem>>, vector<1x1x128xf32>
    %15 = vector.shape_cast %14 : vector<1x1x128xf32> to vector<1x128xf32>
    %16 = vector.broadcast %15 : vector<1x128xf32> to vector<64x128xf32>
    %17 = arith.addf %13, %16 : vector<64x128xf32>
    %18 = vector.shape_cast %8 : vector<64x128xf32> to vector<8x8x128xf32>
    %c0_17 = arith.constant 0 : index
    %c0_18 = arith.constant 0 : index
    %c0_19 = arith.constant 0 : index
    %19 = vector.load %arg7[%c0_17, %c0_18, %c0_19] : memref<8x16x128xf32, #tpu.memory_space<vmem>>, vector<8x8x128xf32>
    tpu.vector_store %arg7[%c0_17, %c0_18, %c0_19], %18 {strides = array<i32>} : memref<8x16x128xf32, #tpu.memory_space<vmem>>, vector<8x8x128xf32>,
    %20 = vector.shape_cast %17 : vector<64x128xf32> to vector<8x8x128xf32>
    %c0_20 = arith.constant 0 : index
    %c8 = arith.constant 8 : index
    %c0_21 = arith.constant 0 : index
    %21 = vector.load %arg7[%c0_20, %c8, %c0_21] : memref<8x16x128xf32, #tpu.memory_space<vmem>>, vector<8x8x128xf32>
    tpu.vector_store %arg7[%c0_20, %c8, %c0_21], %20 {strides = array<i32>} : memref<8x16x128xf32, #tpu.memory_space<vmem>>, vector<8x8x128xf32>,
    %c0_22 = arith.constant 0 : index
    %c0_23 = arith.constant 0 : index
    %22 = vector.load %arg5[%c0_22, %c0_23] : memref<64x128xbf16, #tpu.memory_space<vmem>>, vector<64x128xbf16>
    %23 = tpu.iota {dimensions = array<i32: 0>} : vector<16x64xi32>
    %24 = tpu.iota {dimensions = array<i32: 1>} : vector<16x64xi32>
    %c8_i32 = arith.constant 8 : i32
    %25 = vector.broadcast %c8_i32 : i32 to vector<16x64xi32>
    %26 = arith.cmpi slt, %23, %25 : vector<16x64xi32>
    %27 = arith.extui %26 : vector<16x64xi1> to vector<16x64xi32>
    %28 = arith.sitofp %27 : vector<16x64xi32> to vector<16x64xf32>
    %c32_i32 = arith.constant 32 : i32
    %29 = vector.broadcast %c32_i32 : i32 to vector<16x64xi32>
    %30 = arith.cmpi slt, %24, %29 : vector<16x64xi32>
    %31 = arith.extui %30 : vector<16x64xi1> to vector<16x64xi32>
    %32 = arith.sitofp %31 : vector<16x64xi32> to vector<16x64xf32>
    %33 = arith.subf %28, %32 : vector<16x64xf32>
    %34 = math.absf %33 : vector<16x64xf32>
    %cst_24 = arith.constant 1.000000e+00 : f32
    %35 = vector.broadcast %cst_24 : f32 to vector<16x64xf32>
    %36 = arith.subf %35, %34 : vector<16x64xf32>
    %37 = arith.truncf %36 : vector<16x64xf32> to vector<16x64xbf16>
    %cst_25 = arith.constant 0.000000e+00 : bf16
    %38 = vector.broadcast %cst_25 : bf16 to vector<16x64xbf16>
    %cst_26 = arith.constant 0.000000e+00 : f32
    %39 = vector.broadcast %cst_26 : f32 to vector<16x32xf32>
    %c0_i32 = arith.constant 0 : i32
    %40 = arith.index_cast %c0_i32 : i32 to index
    %c0_27 = arith.constant 0 : index
    %c0_28 = arith.constant 0 : index
    %41 = vector.load %arg7[%40, %c0_27, %c0_28] : memref<8x16x128xf32, #tpu.memory_space<vmem>>, vector<1x16x128xf32>
    %42 = vector.shape_cast %41 : vector<1x16x128xf32> to vector<16x128xf32>
    %cst_29 = arith.constant dense<0.000000e+00> : vector<16x128xf32>
    %43 = tpu.matmul %38, %22, %cst_29 {dimension_numbers = #tpu.dot_dimension_numbers<[1], [0], [0], [1], [0, 0, 1, 1], [], []>} : vector<16x64xbf16>, vector<64x128xbf16>, vector<16x128xf32> -> vector<16x128xf32>
    %44 = arith.addf %42, %43 : vector<16x128xf32>
    %45 = vector.extract_strided_slice %44 {offsets = [0, 0], sizes = [16, 96], strides = [1, 1]} : vector<16x128xf32> to vector<16x96xf32>
    %cst_30 = arith.constant 5.000000e-01 : f32
    %46 = vector.broadcast %cst_30 : f32 to vector<16x96xf32>
    %47 = arith.mulf %46, %45 : vector<16x96xf32>
    %48 = math.tanh %47 : vector<16x96xf32>
    %cst_31 = arith.constant 1.000000e+00 : f32
    %49 = vector.broadcast %cst_31 : f32 to vector<16x96xf32>
    %50 = arith.addf %48, %49 : vector<16x96xf32>
    %cst_32 = arith.constant 5.000000e-01 : f32
    %51 = vector.broadcast %cst_32 : f32 to vector<16x96xf32>
    %52 = arith.mulf %51, %50 : vector<16x96xf32>
    %53 = vector.extract_strided_slice %44 {offsets = [0, 96], sizes = [16, 32], strides = [1, 1]} : vector<16x128xf32> to vector<16x32xf32>
    %54 = math.tanh %53 : vector<16x32xf32>
    %55 = vector.extract_strided_slice %52 {offsets = [0, 0], sizes = [16, 32], strides = [1, 1]} : vector<16x96xf32> to vector<16x32xf32>
    %56 = vector.extract_strided_slice %52 {offsets = [0, 32], sizes = [16, 32], strides = [1, 1]} : vector<16x96xf32> to vector<16x32xf32>
    %57 = vector.extract_strided_slice %52 {offsets = [0, 64], sizes = [16, 32], strides = [1, 1]} : vector<16x96xf32> to vector<16x32xf32>
    %58 = arith.mulf %56, %39 : vector<16x32xf32>
    %59 = arith.mulf %55, %54 : vector<16x32xf32>
    %60 = arith.addf %58, %59 : vector<16x32xf32>
    %61 = math.tanh %60 : vector<16x32xf32>
    %62 = arith.mulf %57, %61 : vector<16x32xf32>
    %63 = vector.extract_strided_slice %62 {offsets = [0, 0], sizes = [8, 32], strides = [1, 1]} : vector<16x32xf32> to vector<8x32xf32>
    %64 = arith.index_cast %c0_i32 : i32 to index
    %c0_33 = arith.constant 0 : index
    %c0_34 = arith.constant 0 : index
    %65 = vector.load %arg6[%64, %c0_33, %c0_34] : memref<8x8x64xf32, #tpu.memory_space<vmem>>, vector<1x8x32xf32>
    %66 = vector.shape_cast %65 : vector<1x8x32xf32> to vector<8x32xf32>
    %67 = vector.shape_cast %63 : vector<8x32xf32> to vector<1x8x32xf32>
    tpu.vector_store %arg6[%64, %c0_33, %c0_34], %67 {strides = array<i32>} : memref<8x8x64xf32, #tpu.memory_space<vmem>>, vector<1x8x32xf32>,
    %68 = vector.extract_strided_slice %62 {offsets = [8, 0], sizes = [8, 32], strides = [1, 1]} : vector<16x32xf32> to vector<8x32xf32>
    %c7_i32 = arith.constant 7 : i32
    %69 = arith.subi %c7_i32, %c0_i32 : i32
    %70 = arith.index_cast %69 : i32 to index
    %c0_35 = arith.constant 0 : index
    %c32 = arith.constant 32 : index
    %71 = vector.load %arg6[%70, %c0_35, %c32] : memref<8x8x64xf32, #tpu.memory_space<vmem>>, vector<1x8x32xf32>
    %72 = vector.shape_cast %71 : vector<1x8x32xf32> to vector<8x32xf32>
    %73 = vector.shape_cast %68 : vector<8x32xf32> to vector<1x8x32xf32>
    tpu.vector_store %arg6[%70, %c0_35, %c32], %73 {strides = array<i32>} : memref<8x8x64xf32, #tpu.memory_space<vmem>>, vector<1x8x32xf32>,
    %74 = arith.truncf %62 : vector<16x32xf32> to vector<16x32xbf16>
    %75 = tpu.concatenate %74, %74 in 1 : vector<16x32xbf16>, vector<16x32xbf16> -> vector<16x64xbf16>
    %76 = arith.mulf %75, %37 : vector<16x64xbf16>
    %c1_i32 = arith.constant 1 : i32
    %77 = arith.index_cast %c1_i32 : i32 to index
    %c0_36 = arith.constant 0 : index
    %c0_37 = arith.constant 0 : index
    %78 = vector.load %arg7[%77, %c0_36, %c0_37] : memref<8x16x128xf32, #tpu.memory_space<vmem>>, vector<1x16x128xf32>
    %79 = vector.shape_cast %78 : vector<1x16x128xf32> to vector<16x128xf32>
    %cst_38 = arith.constant dense<0.000000e+00> : vector<16x128xf32>
    %80 = tpu.matmul %76, %22, %cst_38 {dimension_numbers = #tpu.dot_dimension_numbers<[1], [0], [0], [1], [0, 0, 1, 1], [], []>} : vector<16x64xbf16>, vector<64x128xbf16>, vector<16x128xf32> -> vector<16x128xf32>
    %81 = arith.addf %79, %80 : vector<16x128xf32>
    %82 = vector.extract_strided_slice %81 {offsets = [0, 0], sizes = [16, 96], strides = [1, 1]} : vector<16x128xf32> to vector<16x96xf32>
    %cst_39 = arith.constant 5.000000e-01 : f32
    %83 = vector.broadcast %cst_39 : f32 to vector<16x96xf32>
    %84 = arith.mulf %83, %82 : vector<16x96xf32>
    %85 = math.tanh %84 : vector<16x96xf32>
    %cst_40 = arith.constant 1.000000e+00 : f32
    %86 = vector.broadcast %cst_40 : f32 to vector<16x96xf32>
    %87 = arith.addf %85, %86 : vector<16x96xf32>
    %cst_41 = arith.constant 5.000000e-01 : f32
    %88 = vector.broadcast %cst_41 : f32 to vector<16x96xf32>
    %89 = arith.mulf %88, %87 : vector<16x96xf32>
    %90 = vector.extract_strided_slice %81 {offsets = [0, 96], sizes = [16, 32], strides = [1, 1]} : vector<16x128xf32> to vector<16x32xf32>
    %91 = math.tanh %90 : vector<16x32xf32>
    %92 = vector.extract_strided_slice %89 {offsets = [0, 0], sizes = [16, 32], strides = [1, 1]} : vector<16x96xf32> to vector<16x32xf32>
    %93 = vector.extract_strided_slice %89 {offsets = [0, 32], sizes = [16, 32], strides = [1, 1]} : vector<16x96xf32> to vector<16x32xf32>
    %94 = vector.extract_strided_slice %89 {offsets = [0, 64], sizes = [16, 32], strides = [1, 1]} : vector<16x96xf32> to vector<16x32xf32>
    %95 = arith.mulf %93, %60 : vector<16x32xf32>
    %96 = arith.mulf %92, %91 : vector<16x32xf32>
    %97 = arith.addf %95, %96 : vector<16x32xf32>
    %98 = math.tanh %97 : vector<16x32xf32>
    %99 = arith.mulf %94, %98 : vector<16x32xf32>
    %100 = vector.extract_strided_slice %99 {offsets = [0, 0], sizes = [8, 32], strides = [1, 1]} : vector<16x32xf32> to vector<8x32xf32>
    %101 = arith.index_cast %c1_i32 : i32 to index
    %c0_42 = arith.constant 0 : index
    %c0_43 = arith.constant 0 : index
    %102 = vector.load %arg6[%101, %c0_42, %c0_43] : memref<8x8x64xf32, #tpu.memory_space<vmem>>, vector<1x8x32xf32>
    %103 = vector.shape_cast %102 : vector<1x8x32xf32> to vector<8x32xf32>
    %104 = vector.shape_cast %100 : vector<8x32xf32> to vector<1x8x32xf32>
    tpu.vector_store %arg6[%101, %c0_42, %c0_43], %104 {strides = array<i32>} : memref<8x8x64xf32, #tpu.memory_space<vmem>>, vector<1x8x32xf32>,
    %105 = vector.extract_strided_slice %99 {offsets = [8, 0], sizes = [8, 32], strides = [1, 1]} : vector<16x32xf32> to vector<8x32xf32>
    %c7_i32_44 = arith.constant 7 : i32
    %106 = arith.subi %c7_i32_44, %c1_i32 : i32
    %107 = arith.index_cast %106 : i32 to index
    %c0_45 = arith.constant 0 : index
    %c32_46 = arith.constant 32 : index
    %108 = vector.load %arg6[%107, %c0_45, %c32_46] : memref<8x8x64xf32, #tpu.memory_space<vmem>>, vector<1x8x32xf32>
    %109 = vector.shape_cast %108 : vector<1x8x32xf32> to vector<8x32xf32>
    %110 = vector.shape_cast %105 : vector<8x32xf32> to vector<1x8x32xf32>
    tpu.vector_store %arg6[%107, %c0_45, %c32_46], %110 {strides = array<i32>} : memref<8x8x64xf32, #tpu.memory_space<vmem>>, vector<1x8x32xf32>,
    %111 = arith.truncf %99 : vector<16x32xf32> to vector<16x32xbf16>
    %112 = tpu.concatenate %111, %111 in 1 : vector<16x32xbf16>, vector<16x32xbf16> -> vector<16x64xbf16>
    %113 = arith.mulf %112, %37 : vector<16x64xbf16>
    %c2_i32 = arith.constant 2 : i32
    %114 = arith.index_cast %c2_i32 : i32 to index
    %c0_47 = arith.constant 0 : index
    %c0_48 = arith.constant 0 : index
    %115 = vector.load %arg7[%114, %c0_47, %c0_48] : memref<8x16x128xf32, #tpu.memory_space<vmem>>, vector<1x16x128xf32>
    %116 = vector.shape_cast %115 : vector<1x16x128xf32> to vector<16x128xf32>
    %cst_49 = arith.constant dense<0.000000e+00> : vector<16x128xf32>
    %117 = tpu.matmul %113, %22, %cst_49 {dimension_numbers = #tpu.dot_dimension_numbers<[1], [0], [0], [1], [0, 0, 1, 1], [], []>} : vector<16x64xbf16>, vector<64x128xbf16>, vector<16x128xf32> -> vector<16x128xf32>
    %118 = arith.addf %116, %117 : vector<16x128xf32>
    %119 = vector.extract_strided_slice %118 {offsets = [0, 0], sizes = [16, 96], strides = [1, 1]} : vector<16x128xf32> to vector<16x96xf32>
    %cst_50 = arith.constant 5.000000e-01 : f32
    %120 = vector.broadcast %cst_50 : f32 to vector<16x96xf32>
    %121 = arith.mulf %120, %119 : vector<16x96xf32>
    %122 = math.tanh %121 : vector<16x96xf32>
    %cst_51 = arith.constant 1.000000e+00 : f32
    %123 = vector.broadcast %cst_51 : f32 to vector<16x96xf32>
    %124 = arith.addf %122, %123 : vector<16x96xf32>
    %cst_52 = arith.constant 5.000000e-01 : f32
    %125 = vector.broadcast %cst_52 : f32 to vector<16x96xf32>
    %126 = arith.mulf %125, %124 : vector<16x96xf32>
    %127 = vector.extract_strided_slice %118 {offsets = [0, 96], sizes = [16, 32], strides = [1, 1]} : vector<16x128xf32> to vector<16x32xf32>
    %128 = math.tanh %127 : vector<16x32xf32>
    %129 = vector.extract_strided_slice %126 {offsets = [0, 0], sizes = [16, 32], strides = [1, 1]} : vector<16x96xf32> to vector<16x32xf32>
    %130 = vector.extract_strided_slice %126 {offsets = [0, 32], sizes = [16, 32], strides = [1, 1]} : vector<16x96xf32> to vector<16x32xf32>
    %131 = vector.extract_strided_slice %126 {offsets = [0, 64], sizes = [16, 32], strides = [1, 1]} : vector<16x96xf32> to vector<16x32xf32>
    %132 = arith.mulf %130, %97 : vector<16x32xf32>
    %133 = arith.mulf %129, %128 : vector<16x32xf32>
    %134 = arith.addf %132, %133 : vector<16x32xf32>
    %135 = math.tanh %134 : vector<16x32xf32>
    %136 = arith.mulf %131, %135 : vector<16x32xf32>
    %137 = vector.extract_strided_slice %136 {offsets = [0, 0], sizes = [8, 32], strides = [1, 1]} : vector<16x32xf32> to vector<8x32xf32>
    %138 = arith.index_cast %c2_i32 : i32 to index
    %c0_53 = arith.constant 0 : index
    %c0_54 = arith.constant 0 : index
    %139 = vector.load %arg6[%138, %c0_53, %c0_54] : memref<8x8x64xf32, #tpu.memory_space<vmem>>, vector<1x8x32xf32>
    %140 = vector.shape_cast %139 : vector<1x8x32xf32> to vector<8x32xf32>
    %141 = vector.shape_cast %137 : vector<8x32xf32> to vector<1x8x32xf32>
    tpu.vector_store %arg6[%138, %c0_53, %c0_54], %141 {strides = array<i32>} : memref<8x8x64xf32, #tpu.memory_space<vmem>>, vector<1x8x32xf32>,
    %142 = vector.extract_strided_slice %136 {offsets = [8, 0], sizes = [8, 32], strides = [1, 1]} : vector<16x32xf32> to vector<8x32xf32>
    %c7_i32_55 = arith.constant 7 : i32
    %143 = arith.subi %c7_i32_55, %c2_i32 : i32
    %144 = arith.index_cast %143 : i32 to index
    %c0_56 = arith.constant 0 : index
    %c32_57 = arith.constant 32 : index
    %145 = vector.load %arg6[%144, %c0_56, %c32_57] : memref<8x8x64xf32, #tpu.memory_space<vmem>>, vector<1x8x32xf32>
    %146 = vector.shape_cast %145 : vector<1x8x32xf32> to vector<8x32xf32>
    %147 = vector.shape_cast %142 : vector<8x32xf32> to vector<1x8x32xf32>
    tpu.vector_store %arg6[%144, %c0_56, %c32_57], %147 {strides = array<i32>} : memref<8x8x64xf32, #tpu.memory_space<vmem>>, vector<1x8x32xf32>,
    %148 = arith.truncf %136 : vector<16x32xf32> to vector<16x32xbf16>
    %149 = tpu.concatenate %148, %148 in 1 : vector<16x32xbf16>, vector<16x32xbf16> -> vector<16x64xbf16>
    %150 = arith.mulf %149, %37 : vector<16x64xbf16>
    %c3_i32 = arith.constant 3 : i32
    %151 = arith.index_cast %c3_i32 : i32 to index
    %c0_58 = arith.constant 0 : index
    %c0_59 = arith.constant 0 : index
    %152 = vector.load %arg7[%151, %c0_58, %c0_59] : memref<8x16x128xf32, #tpu.memory_space<vmem>>, vector<1x16x128xf32>
    %153 = vector.shape_cast %152 : vector<1x16x128xf32> to vector<16x128xf32>
    %cst_60 = arith.constant dense<0.000000e+00> : vector<16x128xf32>
    %154 = tpu.matmul %150, %22, %cst_60 {dimension_numbers = #tpu.dot_dimension_numbers<[1], [0], [0], [1], [0, 0, 1, 1], [], []>} : vector<16x64xbf16>, vector<64x128xbf16>, vector<16x128xf32> -> vector<16x128xf32>
    %155 = arith.addf %153, %154 : vector<16x128xf32>
    %156 = vector.extract_strided_slice %155 {offsets = [0, 0], sizes = [16, 96], strides = [1, 1]} : vector<16x128xf32> to vector<16x96xf32>
    %cst_61 = arith.constant 5.000000e-01 : f32
    %157 = vector.broadcast %cst_61 : f32 to vector<16x96xf32>
    %158 = arith.mulf %157, %156 : vector<16x96xf32>
    %159 = math.tanh %158 : vector<16x96xf32>
    %cst_62 = arith.constant 1.000000e+00 : f32
    %160 = vector.broadcast %cst_62 : f32 to vector<16x96xf32>
    %161 = arith.addf %159, %160 : vector<16x96xf32>
    %cst_63 = arith.constant 5.000000e-01 : f32
    %162 = vector.broadcast %cst_63 : f32 to vector<16x96xf32>
    %163 = arith.mulf %162, %161 : vector<16x96xf32>
    %164 = vector.extract_strided_slice %155 {offsets = [0, 96], sizes = [16, 32], strides = [1, 1]} : vector<16x128xf32> to vector<16x32xf32>
    %165 = math.tanh %164 : vector<16x32xf32>
    %166 = vector.extract_strided_slice %163 {offsets = [0, 0], sizes = [16, 32], strides = [1, 1]} : vector<16x96xf32> to vector<16x32xf32>
    %167 = vector.extract_strided_slice %163 {offsets = [0, 32], sizes = [16, 32], strides = [1, 1]} : vector<16x96xf32> to vector<16x32xf32>
    %168 = vector.extract_strided_slice %163 {offsets = [0, 64], sizes = [16, 32], strides = [1, 1]} : vector<16x96xf32> to vector<16x32xf32>
    %169 = arith.mulf %167, %134 : vector<16x32xf32>
    %170 = arith.mulf %166, %165 : vector<16x32xf32>
    %171 = arith.addf %169, %170 : vector<16x32xf32>
    %172 = math.tanh %171 : vector<16x32xf32>
    %173 = arith.mulf %168, %172 : vector<16x32xf32>
    %174 = vector.extract_strided_slice %173 {offsets = [0, 0], sizes = [8, 32], strides = [1, 1]} : vector<16x32xf32> to vector<8x32xf32>
    %175 = arith.index_cast %c3_i32 : i32 to index
    %c0_64 = arith.constant 0 : index
    %c0_65 = arith.constant 0 : index
    %176 = vector.load %arg6[%175, %c0_64, %c0_65] : memref<8x8x64xf32, #tpu.memory_space<vmem>>, vector<1x8x32xf32>
    %177 = vector.shape_cast %176 : vector<1x8x32xf32> to vector<8x32xf32>
    %178 = vector.shape_cast %174 : vector<8x32xf32> to vector<1x8x32xf32>
    tpu.vector_store %arg6[%175, %c0_64, %c0_65], %178 {strides = array<i32>} : memref<8x8x64xf32, #tpu.memory_space<vmem>>, vector<1x8x32xf32>,
    %179 = vector.extract_strided_slice %173 {offsets = [8, 0], sizes = [8, 32], strides = [1, 1]} : vector<16x32xf32> to vector<8x32xf32>
    %c7_i32_66 = arith.constant 7 : i32
    %180 = arith.subi %c7_i32_66, %c3_i32 : i32
    %181 = arith.index_cast %180 : i32 to index
    %c0_67 = arith.constant 0 : index
    %c32_68 = arith.constant 32 : index
    %182 = vector.load %arg6[%181, %c0_67, %c32_68] : memref<8x8x64xf32, #tpu.memory_space<vmem>>, vector<1x8x32xf32>
    %183 = vector.shape_cast %182 : vector<1x8x32xf32> to vector<8x32xf32>
    %184 = vector.shape_cast %179 : vector<8x32xf32> to vector<1x8x32xf32>
    tpu.vector_store %arg6[%181, %c0_67, %c32_68], %184 {strides = array<i32>} : memref<8x8x64xf32, #tpu.memory_space<vmem>>, vector<1x8x32xf32>,
    %185 = arith.truncf %173 : vector<16x32xf32> to vector<16x32xbf16>
    %186 = tpu.concatenate %185, %185 in 1 : vector<16x32xbf16>, vector<16x32xbf16> -> vector<16x64xbf16>
    %187 = arith.mulf %186, %37 : vector<16x64xbf16>
    %c4_i32 = arith.constant 4 : i32
    %188 = arith.index_cast %c4_i32 : i32 to index
    %c0_69 = arith.constant 0 : index
    %c0_70 = arith.constant 0 : index
    %189 = vector.load %arg7[%188, %c0_69, %c0_70] : memref<8x16x128xf32, #tpu.memory_space<vmem>>, vector<1x16x128xf32>
    %190 = vector.shape_cast %189 : vector<1x16x128xf32> to vector<16x128xf32>
    %cst_71 = arith.constant dense<0.000000e+00> : vector<16x128xf32>
    %191 = tpu.matmul %187, %22, %cst_71 {dimension_numbers = #tpu.dot_dimension_numbers<[1], [0], [0], [1], [0, 0, 1, 1], [], []>} : vector<16x64xbf16>, vector<64x128xbf16>, vector<16x128xf32> -> vector<16x128xf32>
    %192 = arith.addf %190, %191 : vector<16x128xf32>
    %193 = vector.extract_strided_slice %192 {offsets = [0, 0], sizes = [16, 96], strides = [1, 1]} : vector<16x128xf32> to vector<16x96xf32>
    %cst_72 = arith.constant 5.000000e-01 : f32
    %194 = vector.broadcast %cst_72 : f32 to vector<16x96xf32>
    %195 = arith.mulf %194, %193 : vector<16x96xf32>
    %196 = math.tanh %195 : vector<16x96xf32>
    %cst_73 = arith.constant 1.000000e+00 : f32
    %197 = vector.broadcast %cst_73 : f32 to vector<16x96xf32>
    %198 = arith.addf %196, %197 : vector<16x96xf32>
    %cst_74 = arith.constant 5.000000e-01 : f32
    %199 = vector.broadcast %cst_74 : f32 to vector<16x96xf32>
    %200 = arith.mulf %199, %198 : vector<16x96xf32>
    %201 = vector.extract_strided_slice %192 {offsets = [0, 96], sizes = [16, 32], strides = [1, 1]} : vector<16x128xf32> to vector<16x32xf32>
    %202 = math.tanh %201 : vector<16x32xf32>
    %203 = vector.extract_strided_slice %200 {offsets = [0, 0], sizes = [16, 32], strides = [1, 1]} : vector<16x96xf32> to vector<16x32xf32>
    %204 = vector.extract_strided_slice %200 {offsets = [0, 32], sizes = [16, 32], strides = [1, 1]} : vector<16x96xf32> to vector<16x32xf32>
    %205 = vector.extract_strided_slice %200 {offsets = [0, 64], sizes = [16, 32], strides = [1, 1]} : vector<16x96xf32> to vector<16x32xf32>
    %206 = arith.mulf %204, %171 : vector<16x32xf32>
    %207 = arith.mulf %203, %202 : vector<16x32xf32>
    %208 = arith.addf %206, %207 : vector<16x32xf32>
    %209 = math.tanh %208 : vector<16x32xf32>
    %210 = arith.mulf %205, %209 : vector<16x32xf32>
    %211 = vector.extract_strided_slice %210 {offsets = [0, 0], sizes = [8, 32], strides = [1, 1]} : vector<16x32xf32> to vector<8x32xf32>
    %212 = arith.index_cast %c4_i32 : i32 to index
    %c0_75 = arith.constant 0 : index
    %c0_76 = arith.constant 0 : index
    %213 = vector.load %arg6[%212, %c0_75, %c0_76] : memref<8x8x64xf32, #tpu.memory_space<vmem>>, vector<1x8x32xf32>
    %214 = vector.shape_cast %213 : vector<1x8x32xf32> to vector<8x32xf32>
    %215 = vector.shape_cast %211 : vector<8x32xf32> to vector<1x8x32xf32>
    tpu.vector_store %arg6[%212, %c0_75, %c0_76], %215 {strides = array<i32>} : memref<8x8x64xf32, #tpu.memory_space<vmem>>, vector<1x8x32xf32>,
    %216 = vector.extract_strided_slice %210 {offsets = [8, 0], sizes = [8, 32], strides = [1, 1]} : vector<16x32xf32> to vector<8x32xf32>
    %c7_i32_77 = arith.constant 7 : i32
    %217 = arith.subi %c7_i32_77, %c4_i32 : i32
    %218 = arith.index_cast %217 : i32 to index
    %c0_78 = arith.constant 0 : index
    %c32_79 = arith.constant 32 : index
    %219 = vector.load %arg6[%218, %c0_78, %c32_79] : memref<8x8x64xf32, #tpu.memory_space<vmem>>, vector<1x8x32xf32>
    %220 = vector.shape_cast %219 : vector<1x8x32xf32> to vector<8x32xf32>
    %221 = vector.shape_cast %216 : vector<8x32xf32> to vector<1x8x32xf32>
    tpu.vector_store %arg6[%218, %c0_78, %c32_79], %221 {strides = array<i32>} : memref<8x8x64xf32, #tpu.memory_space<vmem>>, vector<1x8x32xf32>,
    %222 = arith.truncf %210 : vector<16x32xf32> to vector<16x32xbf16>
    %223 = tpu.concatenate %222, %222 in 1 : vector<16x32xbf16>, vector<16x32xbf16> -> vector<16x64xbf16>
    %224 = arith.mulf %223, %37 : vector<16x64xbf16>
    %c5_i32 = arith.constant 5 : i32
    %225 = arith.index_cast %c5_i32 : i32 to index
    %c0_80 = arith.constant 0 : index
    %c0_81 = arith.constant 0 : index
    %226 = vector.load %arg7[%225, %c0_80, %c0_81] : memref<8x16x128xf32, #tpu.memory_space<vmem>>, vector<1x16x128xf32>
    %227 = vector.shape_cast %226 : vector<1x16x128xf32> to vector<16x128xf32>
    %cst_82 = arith.constant dense<0.000000e+00> : vector<16x128xf32>
    %228 = tpu.matmul %224, %22, %cst_82 {dimension_numbers = #tpu.dot_dimension_numbers<[1], [0], [0], [1], [0, 0, 1, 1], [], []>} : vector<16x64xbf16>, vector<64x128xbf16>, vector<16x128xf32> -> vector<16x128xf32>
    %229 = arith.addf %227, %228 : vector<16x128xf32>
    %230 = vector.extract_strided_slice %229 {offsets = [0, 0], sizes = [16, 96], strides = [1, 1]} : vector<16x128xf32> to vector<16x96xf32>
    %cst_83 = arith.constant 5.000000e-01 : f32
    %231 = vector.broadcast %cst_83 : f32 to vector<16x96xf32>
    %232 = arith.mulf %231, %230 : vector<16x96xf32>
    %233 = math.tanh %232 : vector<16x96xf32>
    %cst_84 = arith.constant 1.000000e+00 : f32
    %234 = vector.broadcast %cst_84 : f32 to vector<16x96xf32>
    %235 = arith.addf %233, %234 : vector<16x96xf32>
    %cst_85 = arith.constant 5.000000e-01 : f32
    %236 = vector.broadcast %cst_85 : f32 to vector<16x96xf32>
    %237 = arith.mulf %236, %235 : vector<16x96xf32>
    %238 = vector.extract_strided_slice %229 {offsets = [0, 96], sizes = [16, 32], strides = [1, 1]} : vector<16x128xf32> to vector<16x32xf32>
    %239 = math.tanh %238 : vector<16x32xf32>
    %240 = vector.extract_strided_slice %237 {offsets = [0, 0], sizes = [16, 32], strides = [1, 1]} : vector<16x96xf32> to vector<16x32xf32>
    %241 = vector.extract_strided_slice %237 {offsets = [0, 32], sizes = [16, 32], strides = [1, 1]} : vector<16x96xf32> to vector<16x32xf32>
    %242 = vector.extract_strided_slice %237 {offsets = [0, 64], sizes = [16, 32], strides = [1, 1]} : vector<16x96xf32> to vector<16x32xf32>
    %243 = arith.mulf %241, %208 : vector<16x32xf32>
    %244 = arith.mulf %240, %239 : vector<16x32xf32>
    %245 = arith.addf %243, %244 : vector<16x32xf32>
    %246 = math.tanh %245 : vector<16x32xf32>
    %247 = arith.mulf %242, %246 : vector<16x32xf32>
    %248 = vector.extract_strided_slice %247 {offsets = [0, 0], sizes = [8, 32], strides = [1, 1]} : vector<16x32xf32> to vector<8x32xf32>
    %249 = arith.index_cast %c5_i32 : i32 to index
    %c0_86 = arith.constant 0 : index
    %c0_87 = arith.constant 0 : index
    %250 = vector.load %arg6[%249, %c0_86, %c0_87] : memref<8x8x64xf32, #tpu.memory_space<vmem>>, vector<1x8x32xf32>
    %251 = vector.shape_cast %250 : vector<1x8x32xf32> to vector<8x32xf32>
    %252 = vector.shape_cast %248 : vector<8x32xf32> to vector<1x8x32xf32>
    tpu.vector_store %arg6[%249, %c0_86, %c0_87], %252 {strides = array<i32>} : memref<8x8x64xf32, #tpu.memory_space<vmem>>, vector<1x8x32xf32>,
    %253 = vector.extract_strided_slice %247 {offsets = [8, 0], sizes = [8, 32], strides = [1, 1]} : vector<16x32xf32> to vector<8x32xf32>
    %c7_i32_88 = arith.constant 7 : i32
    %254 = arith.subi %c7_i32_88, %c5_i32 : i32
    %255 = arith.index_cast %254 : i32 to index
    %c0_89 = arith.constant 0 : index
    %c32_90 = arith.constant 32 : index
    %256 = vector.load %arg6[%255, %c0_89, %c32_90] : memref<8x8x64xf32, #tpu.memory_space<vmem>>, vector<1x8x32xf32>
    %257 = vector.shape_cast %256 : vector<1x8x32xf32> to vector<8x32xf32>
    %258 = vector.shape_cast %253 : vector<8x32xf32> to vector<1x8x32xf32>
    tpu.vector_store %arg6[%255, %c0_89, %c32_90], %258 {strides = array<i32>} : memref<8x8x64xf32, #tpu.memory_space<vmem>>, vector<1x8x32xf32>,
    %259 = arith.truncf %247 : vector<16x32xf32> to vector<16x32xbf16>
    %260 = tpu.concatenate %259, %259 in 1 : vector<16x32xbf16>, vector<16x32xbf16> -> vector<16x64xbf16>
    %261 = arith.mulf %260, %37 : vector<16x64xbf16>
    %c6_i32 = arith.constant 6 : i32
    %262 = arith.index_cast %c6_i32 : i32 to index
    %c0_91 = arith.constant 0 : index
    %c0_92 = arith.constant 0 : index
    %263 = vector.load %arg7[%262, %c0_91, %c0_92] : memref<8x16x128xf32, #tpu.memory_space<vmem>>, vector<1x16x128xf32>
    %264 = vector.shape_cast %263 : vector<1x16x128xf32> to vector<16x128xf32>
    %cst_93 = arith.constant dense<0.000000e+00> : vector<16x128xf32>
    %265 = tpu.matmul %261, %22, %cst_93 {dimension_numbers = #tpu.dot_dimension_numbers<[1], [0], [0], [1], [0, 0, 1, 1], [], []>} : vector<16x64xbf16>, vector<64x128xbf16>, vector<16x128xf32> -> vector<16x128xf32>
    %266 = arith.addf %264, %265 : vector<16x128xf32>
    %267 = vector.extract_strided_slice %266 {offsets = [0, 0], sizes = [16, 96], strides = [1, 1]} : vector<16x128xf32> to vector<16x96xf32>
    %cst_94 = arith.constant 5.000000e-01 : f32
    %268 = vector.broadcast %cst_94 : f32 to vector<16x96xf32>
    %269 = arith.mulf %268, %267 : vector<16x96xf32>
    %270 = math.tanh %269 : vector<16x96xf32>
    %cst_95 = arith.constant 1.000000e+00 : f32
    %271 = vector.broadcast %cst_95 : f32 to vector<16x96xf32>
    %272 = arith.addf %270, %271 : vector<16x96xf32>
    %cst_96 = arith.constant 5.000000e-01 : f32
    %273 = vector.broadcast %cst_96 : f32 to vector<16x96xf32>
    %274 = arith.mulf %273, %272 : vector<16x96xf32>
    %275 = vector.extract_strided_slice %266 {offsets = [0, 96], sizes = [16, 32], strides = [1, 1]} : vector<16x128xf32> to vector<16x32xf32>
    %276 = math.tanh %275 : vector<16x32xf32>
    %277 = vector.extract_strided_slice %274 {offsets = [0, 0], sizes = [16, 32], strides = [1, 1]} : vector<16x96xf32> to vector<16x32xf32>
    %278 = vector.extract_strided_slice %274 {offsets = [0, 32], sizes = [16, 32], strides = [1, 1]} : vector<16x96xf32> to vector<16x32xf32>
    %279 = vector.extract_strided_slice %274 {offsets = [0, 64], sizes = [16, 32], strides = [1, 1]} : vector<16x96xf32> to vector<16x32xf32>
    %280 = arith.mulf %278, %245 : vector<16x32xf32>
    %281 = arith.mulf %277, %276 : vector<16x32xf32>
    %282 = arith.addf %280, %281 : vector<16x32xf32>
    %283 = math.tanh %282 : vector<16x32xf32>
    %284 = arith.mulf %279, %283 : vector<16x32xf32>
    %285 = vector.extract_strided_slice %284 {offsets = [0, 0], sizes = [8, 32], strides = [1, 1]} : vector<16x32xf32> to vector<8x32xf32>
    %286 = arith.index_cast %c6_i32 : i32 to index
    %c0_97 = arith.constant 0 : index
    %c0_98 = arith.constant 0 : index
    %287 = vector.load %arg6[%286, %c0_97, %c0_98] : memref<8x8x64xf32, #tpu.memory_space<vmem>>, vector<1x8x32xf32>
    %288 = vector.shape_cast %287 : vector<1x8x32xf32> to vector<8x32xf32>
    %289 = vector.shape_cast %285 : vector<8x32xf32> to vector<1x8x32xf32>
    tpu.vector_store %arg6[%286, %c0_97, %c0_98], %289 {strides = array<i32>} : memref<8x8x64xf32, #tpu.memory_space<vmem>>, vector<1x8x32xf32>,
    %290 = vector.extract_strided_slice %284 {offsets = [8, 0], sizes = [8, 32], strides = [1, 1]} : vector<16x32xf32> to vector<8x32xf32>
    %c7_i32_99 = arith.constant 7 : i32
    %291 = arith.subi %c7_i32_99, %c6_i32 : i32
    %292 = arith.index_cast %291 : i32 to index
    %c0_100 = arith.constant 0 : index
    %c32_101 = arith.constant 32 : index
    %293 = vector.load %arg6[%292, %c0_100, %c32_101] : memref<8x8x64xf32, #tpu.memory_space<vmem>>, vector<1x8x32xf32>
    %294 = vector.shape_cast %293 : vector<1x8x32xf32> to vector<8x32xf32>
    %295 = vector.shape_cast %290 : vector<8x32xf32> to vector<1x8x32xf32>
    tpu.vector_store %arg6[%292, %c0_100, %c32_101], %295 {strides = array<i32>} : memref<8x8x64xf32, #tpu.memory_space<vmem>>, vector<1x8x32xf32>,
    %296 = arith.truncf %284 : vector<16x32xf32> to vector<16x32xbf16>
    %297 = tpu.concatenate %296, %296 in 1 : vector<16x32xbf16>, vector<16x32xbf16> -> vector<16x64xbf16>
    %298 = arith.mulf %297, %37 : vector<16x64xbf16>
    %c7_i32_102 = arith.constant 7 : i32
    %299 = arith.index_cast %c7_i32_102 : i32 to index
    %c0_103 = arith.constant 0 : index
    %c0_104 = arith.constant 0 : index
    %300 = vector.load %arg7[%299, %c0_103, %c0_104] : memref<8x16x128xf32, #tpu.memory_space<vmem>>, vector<1x16x128xf32>
    %301 = vector.shape_cast %300 : vector<1x16x128xf32> to vector<16x128xf32>
    %cst_105 = arith.constant dense<0.000000e+00> : vector<16x128xf32>
    %302 = tpu.matmul %298, %22, %cst_105 {dimension_numbers = #tpu.dot_dimension_numbers<[1], [0], [0], [1], [0, 0, 1, 1], [], []>} : vector<16x64xbf16>, vector<64x128xbf16>, vector<16x128xf32> -> vector<16x128xf32>
    %303 = arith.addf %301, %302 : vector<16x128xf32>
    %304 = vector.extract_strided_slice %303 {offsets = [0, 0], sizes = [16, 96], strides = [1, 1]} : vector<16x128xf32> to vector<16x96xf32>
    %cst_106 = arith.constant 5.000000e-01 : f32
    %305 = vector.broadcast %cst_106 : f32 to vector<16x96xf32>
    %306 = arith.mulf %305, %304 : vector<16x96xf32>
    %307 = math.tanh %306 : vector<16x96xf32>
    %cst_107 = arith.constant 1.000000e+00 : f32
    %308 = vector.broadcast %cst_107 : f32 to vector<16x96xf32>
    %309 = arith.addf %307, %308 : vector<16x96xf32>
    %cst_108 = arith.constant 5.000000e-01 : f32
    %310 = vector.broadcast %cst_108 : f32 to vector<16x96xf32>
    %311 = arith.mulf %310, %309 : vector<16x96xf32>
    %312 = vector.extract_strided_slice %303 {offsets = [0, 96], sizes = [16, 32], strides = [1, 1]} : vector<16x128xf32> to vector<16x32xf32>
    %313 = math.tanh %312 : vector<16x32xf32>
    %314 = vector.extract_strided_slice %311 {offsets = [0, 0], sizes = [16, 32], strides = [1, 1]} : vector<16x96xf32> to vector<16x32xf32>
    %315 = vector.extract_strided_slice %311 {offsets = [0, 32], sizes = [16, 32], strides = [1, 1]} : vector<16x96xf32> to vector<16x32xf32>
    %316 = vector.extract_strided_slice %311 {offsets = [0, 64], sizes = [16, 32], strides = [1, 1]} : vector<16x96xf32> to vector<16x32xf32>
    %317 = arith.mulf %315, %282 : vector<16x32xf32>
    %318 = arith.mulf %314, %313 : vector<16x32xf32>
    %319 = arith.addf %317, %318 : vector<16x32xf32>
    %320 = math.tanh %319 : vector<16x32xf32>
    %321 = arith.mulf %316, %320 : vector<16x32xf32>
    %322 = vector.extract_strided_slice %321 {offsets = [0, 0], sizes = [8, 32], strides = [1, 1]} : vector<16x32xf32> to vector<8x32xf32>
    %323 = arith.index_cast %c7_i32_102 : i32 to index
    %c0_109 = arith.constant 0 : index
    %c0_110 = arith.constant 0 : index
    %324 = vector.load %arg6[%323, %c0_109, %c0_110] : memref<8x8x64xf32, #tpu.memory_space<vmem>>, vector<1x8x32xf32>
    %325 = vector.shape_cast %324 : vector<1x8x32xf32> to vector<8x32xf32>
    %326 = vector.shape_cast %322 : vector<8x32xf32> to vector<1x8x32xf32>
    tpu.vector_store %arg6[%323, %c0_109, %c0_110], %326 {strides = array<i32>} : memref<8x8x64xf32, #tpu.memory_space<vmem>>, vector<1x8x32xf32>,
    %327 = vector.extract_strided_slice %321 {offsets = [8, 0], sizes = [8, 32], strides = [1, 1]} : vector<16x32xf32> to vector<8x32xf32>
    %c7_i32_111 = arith.constant 7 : i32
    %328 = arith.subi %c7_i32_111, %c7_i32_102 : i32
    %329 = arith.index_cast %328 : i32 to index
    %c0_112 = arith.constant 0 : index
    %c32_113 = arith.constant 32 : index
    %330 = vector.load %arg6[%329, %c0_112, %c32_113] : memref<8x8x64xf32, #tpu.memory_space<vmem>>, vector<1x8x32xf32>
    %331 = vector.shape_cast %330 : vector<1x8x32xf32> to vector<8x32xf32>
    %332 = vector.shape_cast %327 : vector<8x32xf32> to vector<1x8x32xf32>
    tpu.vector_store %arg6[%329, %c0_112, %c32_113], %332 {strides = array<i32>} : memref<8x8x64xf32, #tpu.memory_space<vmem>>, vector<1x8x32xf32>,
    %333 = arith.truncf %321 : vector<16x32xf32> to vector<16x32xbf16>
    %334 = tpu.concatenate %333, %333 in 1 : vector<16x32xbf16>, vector<16x32xbf16> -> vector<16x64xbf16>
    %335 = arith.mulf %334, %37 : vector<16x64xbf16>
    %c8_i32_114 = arith.constant 8 : i32
    return
  }
  func.func @transform_0(%arg0: i32) -> (i32, i32, i32) {
    %c0_i32 = arith.constant 0 : i32
    %c0_i32_0 = arith.constant 0 : i32
    %c0_i32_1 = arith.constant 0 : i32
    return %c0_i32, %arg0, %c0_i32_0 : i32, i32, i32
  }
  func.func @transform_1(%arg0: i32) -> (i32, i32, i32) {
    %c0_i32 = arith.constant 0 : i32
    %c0_i32_0 = arith.constant 0 : i32
    %c0_i32_1 = arith.constant 0 : i32
    return %c0_i32, %arg0, %c0_i32_0 : i32, i32, i32
  }
  func.func @transform_2(%arg0: i32) -> (i32, i32, i32) {
    %c0_i32 = arith.constant 0 : i32
    %c0_i32_0 = arith.constant 0 : i32
    %c0_i32_1 = arith.constant 0 : i32
    %c0_i32_2 = arith.constant 0 : i32
    return %c0_i32, %c0_i32_0, %c0_i32_1 : i32, i32, i32
  }
  func.func @transform_3(%arg0: i32) -> (i32, i32, i32) {
    %c0_i32 = arith.constant 0 : i32
    %c0_i32_0 = arith.constant 0 : i32
    %c0_i32_1 = arith.constant 0 : i32
    %c0_i32_2 = arith.constant 0 : i32
    return %c0_i32, %c0_i32_0, %c0_i32_1 : i32, i32, i32
  }
  func.func @transform_4(%arg0: i32) -> (i32, i32) {
    %c0_i32 = arith.constant 0 : i32
    %c0_i32_0 = arith.constant 0 : i32
    %c0_i32_1 = arith.constant 0 : i32
    return %c0_i32, %c0_i32_0 : i32, i32
  }
  func.func @transform_5(%arg0: i32) -> (i32, i32, i32) {
    %c0_i32 = arith.constant 0 : i32
    %c0_i32_0 = arith.constant 0 : i32
    %c0_i32_1 = arith.constant 0 : i32
    return %c0_i32, %arg0, %c0_i32_0 : i32, i32, i32
  }
}

</mosaic_0001>

<llo_original>
// kernel: mlstm_forward.1
$region0: #{mlstm_forward.1}
  #allocation0 [shape = 'u32[]', space=smem, size = 0x4, offset = 0x4, fixed_abs, tag = 'smem constant byte address 0x4 - core index']
  #allocation1 [shape = 'u32[72,128]{1,0:T(1,128)}', space=vmem, size = 0x9000, scoped, tag = 'internal scratch']
  #allocation2 [shape = 'f32[8,16,128]{2,1,0:T(8,128)}', space=vmem, size = 0x10000, scoped, tag = 'scratch operand']
  %s0 = inlined_call_operand.vmem [shape: bf16[8,8,33], index: 0, kind: input, shape index: {}]
  %s1 = inlined_call_operand.vmem [shape: bf16[8,8,33], index: 1, kind: input, shape index: {}]
  %s2 = inlined_call_operand.vmem [shape: bf16[2,33,128], index: 2, kind: input, shape index: {}]
  %s3 = inlined_call_operand.vmem [shape: f32[2,1,128], index: 3, kind: input, shape index: {}]
  %s4 = inlined_call_operand.vmem [shape: bf16[64,128], index: 4, kind: input, shape index: {}]
  %s5 = inlined_call_operand.vmem [shape: f32[8,8,64], index: 5, kind: output, shape index: {}]
  %s6 = sld [smem:[#allocation0]]
  $region30: #{mlstm_forward.1} parent=0
    _
  %s8 = ssub.s32 1, %s6
  %s9 = scalar_select 0, %s8, %s6
  // Predicated region
  $region2: #{mlstm_forward.1} parent=0 // pred_check
    _
  $region3: #{mlstm_forward.1} parent=0 // pred_check_branch
    %11 = sbr.rel (0) target = $region5
  $region4: #{mlstm_forward.1} parent=0 // pred_region
    _
  $region5: #{mlstm_forward.1} parent=0 // pred_fallthru
    _
  // Predicated region
  $region6: #{mlstm_forward.1} parent=0 // pred_check
    _
  $region7: #{mlstm_forward.1} parent=0 // pred_check_branch
    %13 = sbr.rel (0) target = $region9
  $region8: #{mlstm_forward.1} parent=0 // pred_region
    _
  $region9: #{mlstm_forward.1} parent=0 // pred_fallthru
    _
  // Predicated region
  $region10: #{mlstm_forward.1} parent=0 // pred_check
    _
  $region11: #{mlstm_forward.1} parent=0 // pred_check_branch
    %15 = sbr.rel (0) target = $region13
  $region12: #{mlstm_forward.1} parent=0 // pred_region
    _
  $region13: #{mlstm_forward.1} parent=0 // pred_fallthru
    _
  // Predicated region
  $region14: #{mlstm_forward.1} parent=0 // pred_check
    _
  $region15: #{mlstm_forward.1} parent=0 // pred_check_branch
    %17 = sbr.rel (0) target = $region17
  $region16: #{mlstm_forward.1} parent=0 // pred_region
    _
  $region17: #{mlstm_forward.1} parent=0 // pred_fallthru
    _
  // Predicated region
  $region18: #{mlstm_forward.1} parent=0 // pred_check
    _
  $region19: #{mlstm_forward.1} parent=0 // pred_check_branch
    %19 = sbr.rel (0) target = $region21
  $region20: #{mlstm_forward.1} parent=0 // pred_region
    _
  $region21: #{mlstm_forward.1} parent=0 // pred_fallthru
    _
  %v21 = vld [vmem:[%s0] sm:$0xf]
  %v22 = vld [vmem:[%s0 + $0x4] sm:$0xf]
  %v23 = vld [vmem:[%s0 + $0x8] sm:$0xf]
  %v24 = vld [vmem:[%s0 + $0xc] sm:$0xf]
  %v25 = vld [vmem:[%s0 + $0x10] sm:$0xf]
  %v26 = vld [vmem:[%s0 + $0x14] sm:$0xf]
  %v27 = vld [vmem:[%s0 + $0x18] sm:$0xf]
  %v28 = vld [vmem:[%s0 + $0x1c] sm:$0xf]
  %v29 = vld [vmem:[%s2] sm:$0xf]
  %v30 = vld [vmem:[%s2 + $0x4] sm:$0xf]
  %v31 = vld [vmem:[%s2 + $0x8] sm:$0xf]
  %v32 = vld [vmem:[%s2 + $0xc] sm:$0xf]
  %v33 = vld [vmem:[%s2 + $0x10] sm:$0x1]
  %v34 = vld [vmem:[%s3] sm:$0x1]
  %v36 = vperm.slane %v34, 0
  %v46 = vunpack.c.l.b16 %v21
  %v47 = vunpack.c.l.b16 %v22
  %v48 = vunpack.c.l.b16 %v23
  %v49 = vunpack.c.l.b16 %v24
  %v50 = vunpack.c.l.b16 %v25
  %v51 = vunpack.c.l.b16 %v26
  %v52 = vunpack.c.l.b16 %v27
  %v53 = vunpack.c.l.b16 %v28
  %v54 = vpack.c.b16 %v47, %v46
  %v55 = vpack.c.b16 %v49, %v48
  %v56 = vpack.c.b16 %v51, %v50
  %v57 = vpack.c.b16 %v53, %v52
  %v63 = vunpack.c.l.b16 %v29
  %v64 = vunpack.c.l.b16 %v30
  %v65 = vunpack.c.l.b16 %v31
  %v66 = vunpack.c.l.b16 %v32
  %v67 = vunpack.c.l.b16 %v33
  %v68 = vpack.c.b16 %v64, %v63
  %v69 = vpack.c.b16 %v66, %v65
  %v70 = vpack.c.b16 %v67, %v67
  %vm73 = vcmask 269312
  %v75 = vsel %vm73, %v54, 0
  %v78 = vsel %vm73, %v55, 0
  %v81 = vsel %vm73, %v56, 0
  %v84 = vsel %vm73, %v57, 0
  %vm86 = vcmask 1040384
  %v87 = vsel 0, 4294967295, 65535
  %v88 = vsel %vm86, %v87, 0
  %v90 = vand.u32 %v70, %v88
  %92 = vmatpush.bf16.msra.mxu0 0
  %93 = vmatpush.bf16.msra.mxu0 0
  %94 = vmatpush.bf16.msra.mxu0 0
  %95 = vmatpush.bf16.msra.mxu0 0
  %96 = vmatpush.bf16.msra.mxu0 0
  %97 = vmatpush.bf16.msra.mxu0 %v90
  %98 = vmatpush.bf16.msra.mxu0 %v69
  %99 = vmatpush.bf16.msra.mxu0 %v68
  %100 = vmatmul.bf16.gmra.mxu0 %v75
  %v101 = vpop.f32.mrf.mxu0
  %v102 = vadd.f32 %v36, %v101
  %v103 = vpop.f32.mrf.mxu0
  %v104 = vadd.f32 %v36, %v103
  %105 = vmatmul.bf16.gmra.mxu0 %v78
  %v106 = vpop.f32.mrf.mxu0
  %v107 = vadd.f32 %v36, %v106
  %v108 = vpop.f32.mrf.mxu0
  %v109 = vadd.f32 %v36, %v108
  %110 = vmatmul.bf16.gmra.mxu0 %v81
  %v111 = vpop.f32.mrf.mxu0
  %v112 = vadd.f32 %v36, %v111
  %v113 = vpop.f32.mrf.mxu0
  %v114 = vadd.f32 %v36, %v113
  %115 = vmatmul.bf16.gmra.mxu0 %v84
  %v116 = vpop.f32.mrf.mxu0
  %v117 = vadd.f32 %v36, %v116
  %v118 = vpop.f32.mrf.mxu0
  %v119 = vadd.f32 %v36, %v118
  %120 = vdwg.mxu0
  %v121 = vld [vmem:[%s1] sm:$0xf]
  %v122 = vld [vmem:[%s1 + $0x4] sm:$0xf]
  %v123 = vld [vmem:[%s1 + $0x8] sm:$0xf]
  %v124 = vld [vmem:[%s1 + $0xc] sm:$0xf]
  %v125 = vld [vmem:[%s1 + $0x10] sm:$0xf]
  %v126 = vld [vmem:[%s1 + $0x14] sm:$0xf]
  %v127 = vld [vmem:[%s1 + $0x18] sm:$0xf]
  %v128 = vld [vmem:[%s1 + $0x1c] sm:$0xf]
  %s129 = scalar_lea.vmem %s2, 20
  %v130 = vld [vmem:[%s129] sm:$0xf]
  %v131 = vld [vmem:[%s129 + $0x4] sm:$0xf]
  %v132 = vld [vmem:[%s129 + $0x8] sm:$0xf]
  %v133 = vld [vmem:[%s129 + $0xc] sm:$0xf]
  %v134 = vld [vmem:[%s129 + $0x10] sm:$0x1]
  %s135 = scalar_lea.vmem %s3, 1
  %v136 = vld [vmem:[%s135] sm:$0x1]
  %v138 = vperm.slane %v136, 0
  %v148 = vunpack.c.l.b16 %v121
  %v149 = vunpack.c.l.b16 %v122
  %v150 = vunpack.c.l.b16 %v123
  %v151 = vunpack.c.l.b16 %v124
  %v152 = vunpack.c.l.b16 %v125
  %v153 = vunpack.c.l.b16 %v126
  %v154 = vunpack.c.l.b16 %v127
  %v155 = vunpack.c.l.b16 %v128
  %v156 = vpack.c.b16 %v149, %v148
  %v157 = vpack.c.b16 %v151, %v150
  %v158 = vpack.c.b16 %v153, %v152
  %v159 = vpack.c.b16 %v155, %v154
  %v165 = vunpack.c.l.b16 %v130
  %v166 = vunpack.c.l.b16 %v131
  %v167 = vunpack.c.l.b16 %v132
  %v168 = vunpack.c.l.b16 %v133
  %v169 = vunpack.c.l.b16 %v134
  %v170 = vpack.c.b16 %v166, %v165
  %v171 = vpack.c.b16 %v168, %v167
  %v172 = vpack.c.b16 %v169, %v169
  %v176 = vsel %vm73, %v156, 0
  %v179 = vsel %vm73, %v157, 0
  %v182 = vsel %vm73, %v158, 0
  %v185 = vsel %vm73, %v159, 0
  %v188 = vand.u32 %v172, %v88
  %190 = vmatpush.bf16.msra.mxu0 0
  %191 = vmatpush.bf16.msra.mxu0 0
  %192 = vmatpush.bf16.msra.mxu0 0
  %193 = vmatpush.bf16.msra.mxu0 0
  %194 = vmatpush.bf16.msra.mxu0 0
  %195 = vmatpush.bf16.msra.mxu0 %v188
  %196 = vmatpush.bf16.msra.mxu0 %v171
  %197 = vmatpush.bf16.msra.mxu0 %v170
  %198 = vmatmul.bf16.gmra.mxu0 %v176
  %v199 = vpop.f32.mrf.mxu0
  %v200 = vadd.f32 %v138, %v199
  %v201 = vpop.f32.mrf.mxu0
  %v202 = vadd.f32 %v138, %v201
  %203 = vmatmul.bf16.gmra.mxu0 %v179
  %v204 = vpop.f32.mrf.mxu0
  %v205 = vadd.f32 %v138, %v204
  %v206 = vpop.f32.mrf.mxu0
  %v207 = vadd.f32 %v138, %v206
  %208 = vmatmul.bf16.gmra.mxu0 %v182
  %v209 = vpop.f32.mrf.mxu0
  %v210 = vadd.f32 %v138, %v209
  %v211 = vpop.f32.mrf.mxu0
  %v212 = vadd.f32 %v138, %v211
  %213 = vmatmul.bf16.gmra.mxu0 %v185
  %v214 = vpop.f32.mrf.mxu0
  %v215 = vadd.f32 %v138, %v214
  %v216 = vpop.f32.mrf.mxu0
  %v217 = vadd.f32 %v138, %v216
  %218 = vdwg.mxu0
  %219 = vst [vmem:[#allocation2] sm:$0xff] %v102
  %220 = vst [vmem:[#allocation2 + $0x10] sm:$0xff] %v104
  %221 = vst [vmem:[#allocation2 + $0x20] sm:$0xff] %v107
  %222 = vst [vmem:[#allocation2 + $0x30] sm:$0xff] %v109
  %223 = vst [vmem:[#allocation2 + $0x40] sm:$0xff] %v112
  %224 = vst [vmem:[#allocation2 + $0x50] sm:$0xff] %v114
  %225 = vst [vmem:[#allocation2 + $0x60] sm:$0xff] %v117
  %226 = vst [vmem:[#allocation2 + $0x70] sm:$0xff] %v119
  %227 = vst [vmem:[#allocation2 + $0x8] sm:$0xff] %v200
  %228 = vst [vmem:[#allocation2 + $0x18] sm:$0xff] %v202
  %229 = vst [vmem:[#allocation2 + $0x28] sm:$0xff] %v205
  %230 = vst [vmem:[#allocation2 + $0x38] sm:$0xff] %v207
  %231 = vst [vmem:[#allocation2 + $0x48] sm:$0xff] %v210
  %232 = vst [vmem:[#allocation2 + $0x58] sm:$0xff] %v212
  %233 = vst [vmem:[#allocation2 + $0x68] sm:$0xff] %v215
  %234 = vst [vmem:[#allocation2 + $0x78] sm:$0xff] %v217
  %v235 = vld [vmem:[%s4] sm:$0xf]
  %v236 = vld [vmem:[%s4 + $0x4] sm:$0xf]
  %v237 = vld [vmem:[%s4 + $0x8] sm:$0xf]
  %v238 = vld [vmem:[%s4 + $0xc] sm:$0xf]
  %v239 = vld [vmem:[%s4 + $0x10] sm:$0xf]
  %v240 = vld [vmem:[%s4 + $0x14] sm:$0xf]
  %v241 = vld [vmem:[%s4 + $0x18] sm:$0xf]
  %v242 = vld [vmem:[%s4 + $0x1c] sm:$0xf]
  %v243 = vlaneseq
  %v244 = vshrl.u32 %v243, 7
  %v245 = vadd.s32 %v244, 8
  %v246 = vlaneseq
  %v247 = vand.u32 %v246, 127
  %vm248 = vcmp.lt.s32.totalorder %v244, 8
  %vm249 = vcmp.lt.s32.totalorder %v245, 8
  %v250 = vsel %vm248, 1, 0
  %v251 = vsel %vm249, 1, 0
  %v252 = vcvt.s32.f32 %v250
  %v253 = vcvt.s32.f32 %v251
  %vm254 = vcmp.lt.s32.totalorder %v247, 32
  %v255 = vsel %vm254, 1, 0
  %v256 = vcvt.s32.f32 %v255
  %v257 = vsub.f32 %v252, %v256
  %v258 = vsub.f32 %v253, %v256
  %v259 = vand.u32 2147483647, %v257
  %v260 = vand.u32 2147483647, %v258
  %v261 = vsub.f32 1.0, %v259
  %v262 = vsub.f32 1.0, %v260
  %v263 = vpack.c.bf16 %v261, %v261
  %v264 = vpack.c.bf16 %v262, %v262
  %v265 = vld [vmem:[#allocation2] sm:$0xff]
  %v266 = vld [vmem:[#allocation2 + $0x8] sm:$0xff]
  %v275 = vunpack.c.l.b16 %v235
  %v276 = vunpack.c.l.b16 %v236
  %v277 = vunpack.c.l.b16 %v237
  %v278 = vunpack.c.l.b16 %v238
  %v279 = vunpack.c.l.b16 %v239
  %v280 = vunpack.c.l.b16 %v240
  %v281 = vunpack.c.l.b16 %v241
  %v282 = vunpack.c.l.b16 %v242
  %v283 = vpack.c.b16 %v276, %v275
  %v284 = vpack.c.b16 %v278, %v277
  %v285 = vpack.c.b16 %v280, %v279
  %v286 = vpack.c.b16 %v282, %v281
  %vm291 = vcmask 523264
  %v293 = vsel %vm291, 0, 0
  %295 = vmatpush.bf16.msra.mxu0 0
  %296 = vmatpush.bf16.msra.mxu0 0
  %297 = vmatpush.bf16.msra.mxu0 0
  %298 = vmatpush.bf16.msra.mxu0 0
  %299 = vmatpush.bf16.msra.mxu0 %v286
  %300 = vmatpush.bf16.msra.mxu0 %v285
  %301 = vmatpush.bf16.msra.mxu0 %v284
  %302 = vmatpush.bf16.msra.mxu0 %v283
  %303 = vmatmul.bf16.gmra.mxu0 %v293
  %v304 = vpop.f32.mrf.mxu0
  %v305 = vadd.f32 0.0, %v304
  %v306 = vpop.f32.mrf.mxu0
  %v307 = vadd.f32 0.0, %v306
  %308 = vdwg.mxu0
  %v309 = vadd.f32 %v265, %v305
  %v310 = vadd.f32 %v266, %v307
  %v311 = vmul.f32 %v309, 0.5
  %v312 = vmul.f32 %v310, 0.5
  %v313 = vtanh.pop %v311
  %v314 = vtanh.pop %v312
  %v315 = vadd.f32 %v313, 1.0
  %v316 = vadd.f32 %v314, 1.0
  %v317 = vmul.f32 %v315, 0.5
  %v318 = vmul.f32 %v316, 0.5
  %v319 = vtanh.pop %v309
  %v320 = vtanh.pop %v310
  %v321 = vmul.f32 %v317, 0.0
  %v322 = vmul.f32 %v318, 0.0
  %325 = vrot.lane.b32.xlu0 %v319, 32
  %v326 = vpop.permute.xlu0 %325
  %327 = vrot.lane.b32.xlu0 %v320, 32
  %v328 = vpop.permute.xlu0 %327
  %v331 = vmul.f32 %v317, %v326
  %v332 = vmul.f32 %v318, %v328
  %335 = vrot.lane.b32.xlu0 %v331, 32
  %v336 = vpop.permute.xlu0 %335
  %337 = vrot.lane.b32.xlu0 %v332, 32
  %v338 = vpop.permute.xlu0 %337
  %v341 = vadd.f32 %v321, %v336
  %v342 = vadd.f32 %v322, %v338
  %v343 = vtanh.pop %v341
  %v344 = vtanh.pop %v342
  %347 = vrot.lane.b32.xlu0 %v343, 32
  %v348 = vpop.permute.xlu0 %347
  %349 = vrot.lane.b32.xlu0 %v344, 32
  %v350 = vpop.permute.xlu0 %349
  %v353 = vmul.f32 %v317, %v348
  %v354 = vmul.f32 %v318, %v350
  %356 = vrot.lane.b32.xlu0 %v353, 64
  %v357 = vpop.permute.xlu0 %356
  %vm359 = vcmask 261120
  %360 = vst.msk [vmem:[%s5] sm:$0xff] %vm359, %v357
  %362 = vrot.lane.b32.xlu0 %v354, 96
  %v363 = vpop.permute.xlu0 %362
  %s365 = scalar_lea.vmem %s5, 56
  %vm366 = vcmask 523520
  %367 = vst.msk [vmem:[%s365] sm:$0xff] %vm366, %v363
  %v368 = vpack.c.bf16 %v353, %v353
  %v369 = vpack.c.bf16 %v354, %v354
  %v372 = vunpack.c.l.b16 %v368
  %v373 = vunpack.c.l.b16 %v369
  %v374 = vpack.c.b16 %v373, %v372
  %375 = vrot.lane.b32.xlu0 %v374, 64
  %v376 = vpop.permute.xlu0 %375
  %377 = vrot.lane.b32.xlu0 %v374, 96
  %v378 = vpop.permute.xlu0 %377
  %v381 = vsel %vm359, %v376, %v378
  %v383 = vunpack.c.l.bf16 %v381
  %v384 = vunpack.c.h.bf16 %v381
  %v385 = vunpack.c.l.bf16 %v263
  %v386 = vunpack.c.l.bf16 %v264
  %v387 = vmul.f32 %v383, %v385
  %v388 = vmul.f32 %v384, %v386
  %v389 = vpack.c.bf16 %v388, %v387
  %s390 = scalar_lea.vmem [#allocation2], 16
  %v391 = vld [vmem:[%s390] sm:$0xff]
  %v392 = vld [vmem:[%s390 + $0x8] sm:$0xff]
  %v394 = vsel %vm291, %v389, 0
  %396 = vmatpush.bf16.msra.mxu0 0
  %397 = vmatpush.bf16.msra.mxu0 0
  %398 = vmatpush.bf16.msra.mxu0 0
  %399 = vmatpush.bf16.msra.mxu0 0
  %400 = vmatpush.bf16.msra.mxu0 %v286
  %401 = vmatpush.bf16.msra.mxu0 %v285
  %402 = vmatpush.bf16.msra.mxu0 %v284
  %403 = vmatpush.bf16.msra.mxu0 %v283
  %404 = vmatmul.bf16.gmra.mxu0 %v394
  %v405 = vpop.f32.mrf.mxu0
  %v406 = vadd.f32 0.0, %v405
  %v407 = vpop.f32.mrf.mxu0
  %v408 = vadd.f32 0.0, %v407
  %409 = vdwg.mxu0
  %v410 = vadd.f32 %v391, %v406
  %v411 = vadd.f32 %v392, %v408
  %v412 = vmul.f32 %v410, 0.5
  %v413 = vmul.f32 %v411, 0.5
  %v414 = vtanh.pop %v412
  %v415 = vtanh.pop %v413
  %v416 = vadd.f32 %v414, 1.0
  %v417 = vadd.f32 %v415, 1.0
  %v418 = vmul.f32 %v416, 0.5
  %v419 = vmul.f32 %v417, 0.5
  %v420 = vtanh.pop %v410
  %v421 = vtanh.pop %v411
  %v422 = vmul.f32 %v418, %v341
  %v423 = vmul.f32 %v419, %v342
  %426 = vrot.lane.b32.xlu0 %v420, 32
  %v427 = vpop.permute.xlu0 %426
  %428 = vrot.lane.b32.xlu0 %v421, 32
  %v429 = vpop.permute.xlu0 %428
  %v432 = vmul.f32 %v418, %v427
  %v433 = vmul.f32 %v419, %v429
  %436 = vrot.lane.b32.xlu0 %v432, 32
  %v437 = vpop.permute.xlu0 %436
  %438 = vrot.lane.b32.xlu0 %v433, 32
  %v439 = vpop.permute.xlu0 %438
  %v442 = vadd.f32 %v422, %v437
  %v443 = vadd.f32 %v423, %v439
  %v444 = vtanh.pop %v442
  %v445 = vtanh.pop %v443
  %448 = vrot.lane.b32.xlu0 %v444, 32
  %v449 = vpop.permute.xlu0 %448
  %450 = vrot.lane.b32.xlu0 %v445, 32
  %v451 = vpop.permute.xlu0 %450
  %v454 = vmul.f32 %v418, %v449
  %v455 = vmul.f32 %v419, %v451
  %457 = vrot.lane.b32.xlu0 %v454, 64
  %v458 = vpop.permute.xlu0 %457
  %s460 = scalar_lea.vmem %s5, 8
  %461 = vst.msk [vmem:[%s460] sm:$0xff] %vm359, %v458
  %463 = vrot.lane.b32.xlu0 %v455, 96
  %v464 = vpop.permute.xlu0 %463
  %s466 = scalar_lea.vmem %s5, 48
  %467 = vst.msk [vmem:[%s466] sm:$0xff] %vm366, %v464
  %v468 = vpack.c.bf16 %v454, %v454
  %v469 = vpack.c.bf16 %v455, %v455
  %v472 = vunpack.c.l.b16 %v468
  %v473 = vunpack.c.l.b16 %v469
  %v474 = vpack.c.b16 %v473, %v472
  %475 = vrot.lane.b32.xlu0 %v474, 64
  %v476 = vpop.permute.xlu0 %475
  %477 = vrot.lane.b32.xlu0 %v474, 96
  %v478 = vpop.permute.xlu0 %477
  %v481 = vsel %vm359, %v476, %v478
  %v483 = vunpack.c.l.bf16 %v481
  %v484 = vunpack.c.h.bf16 %v481
  %v485 = vmul.f32 %v483, %v385
  %v486 = vmul.f32 %v484, %v386
  %v487 = vpack.c.bf16 %v486, %v485
  %s488 = scalar_lea.vmem [#allocation2], 32
  %v489 = vld [vmem:[%s488] sm:$0xff]
  %v490 = vld [vmem:[%s488 + $0x8] sm:$0xff]
  %v492 = vsel %vm291, %v487, 0
  %494 = vmatpush.bf16.msra.mxu0 0
  %495 = vmatpush.bf16.msra.mxu0 0
  %496 = vmatpush.bf16.msra.mxu0 0
  %497 = vmatpush.bf16.msra.mxu0 0
  %498 = vmatpush.bf16.msra.mxu0 %v286
  %499 = vmatpush.bf16.msra.mxu0 %v285
  %500 = vmatpush.bf16.msra.mxu0 %v284
  %501 = vmatpush.bf16.msra.mxu0 %v283
  %502 = vmatmul.bf16.gmra.mxu0 %v492
  %v503 = vpop.f32.mrf.mxu0
  %v504 = vadd.f32 0.0, %v503
  %v505 = vpop.f32.mrf.mxu0
  %v506 = vadd.f32 0.0, %v505
  %507 = vdwg.mxu0
  %v508 = vadd.f32 %v489, %v504
  %v509 = vadd.f32 %v490, %v506
  %v510 = vmul.f32 %v508, 0.5
  %v511 = vmul.f32 %v509, 0.5
  %v512 = vtanh.pop %v510
  %v513 = vtanh.pop %v511
  %v514 = vadd.f32 %v512, 1.0
  %v515 = vadd.f32 %v513, 1.0
  %v516 = vmul.f32 %v514, 0.5
  %v517 = vmul.f32 %v515, 0.5
  %v518 = vtanh.pop %v508
  %v519 = vtanh.pop %v509
  %v520 = vmul.f32 %v516, %v442
  %v521 = vmul.f32 %v517, %v443
  %524 = vrot.lane.b32.xlu0 %v518, 32
  %v525 = vpop.permute.xlu0 %524
  %526 = vrot.lane.b32.xlu0 %v519, 32
  %v527 = vpop.permute.xlu0 %526
  %v530 = vmul.f32 %v516, %v525
  %v531 = vmul.f32 %v517, %v527
  %534 = vrot.lane.b32.xlu0 %v530, 32
  %v535 = vpop.permute.xlu0 %534
  %536 = vrot.lane.b32.xlu0 %v531, 32
  %v537 = vpop.permute.xlu0 %536
  %v540 = vadd.f32 %v520, %v535
  %v541 = vadd.f32 %v521, %v537
  %v542 = vtanh.pop %v540
  %v543 = vtanh.pop %v541
  %546 = vrot.lane.b32.xlu0 %v542, 32
  %v547 = vpop.permute.xlu0 %546
  %548 = vrot.lane.b32.xlu0 %v543, 32
  %v549 = vpop.permute.xlu0 %548
  %v552 = vmul.f32 %v516, %v547
  %v553 = vmul.f32 %v517, %v549
  %555 = vrot.lane.b32.xlu0 %v552, 64
  %v556 = vpop.permute.xlu0 %555
  %s558 = scalar_lea.vmem %s5, 16
  %559 = vst.msk [vmem:[%s558] sm:$0xff] %vm359, %v556
  %561 = vrot.lane.b32.xlu0 %v553, 96
  %v562 = vpop.permute.xlu0 %561
  %s564 = scalar_lea.vmem %s5, 40
  %565 = vst.msk [vmem:[%s564] sm:$0xff] %vm366, %v562
  %v566 = vpack.c.bf16 %v552, %v552
  %v567 = vpack.c.bf16 %v553, %v553
  %v570 = vunpack.c.l.b16 %v566
  %v571 = vunpack.c.l.b16 %v567
  %v572 = vpack.c.b16 %v571, %v570
  %573 = vrot.lane.b32.xlu0 %v572, 64
  %v574 = vpop.permute.xlu0 %573
  %575 = vrot.lane.b32.xlu0 %v572, 96
  %v576 = vpop.permute.xlu0 %575
  %v579 = vsel %vm359, %v574, %v576
  %v581 = vunpack.c.l.bf16 %v579
  %v582 = vunpack.c.h.bf16 %v579
  %v583 = vmul.f32 %v581, %v385
  %v584 = vmul.f32 %v582, %v386
  %v585 = vpack.c.bf16 %v584, %v583
  %s586 = scalar_lea.vmem [#allocation2], 48
  %v587 = vld [vmem:[%s586] sm:$0xff]
  %v588 = vld [vmem:[%s586 + $0x8] sm:$0xff]
  %v590 = vsel %vm291, %v585, 0
  %592 = vmatpush.bf16.msra.mxu0 0
  %593 = vmatpush.bf16.msra.mxu0 0
  %594 = vmatpush.bf16.msra.mxu0 0
  %595 = vmatpush.bf16.msra.mxu0 0
  %596 = vmatpush.bf16.msra.mxu0 %v286
  %597 = vmatpush.bf16.msra.mxu0 %v285
  %598 = vmatpush.bf16.msra.mxu0 %v284
  %599 = vmatpush.bf16.msra.mxu0 %v283
  %600 = vmatmul.bf16.gmra.mxu0 %v590
  %v601 = vpop.f32.mrf.mxu0
  %v602 = vadd.f32 0.0, %v601
  %v603 = vpop.f32.mrf.mxu0
  %v604 = vadd.f32 0.0, %v603
  %605 = vdwg.mxu0
  %v606 = vadd.f32 %v587, %v602
  %v607 = vadd.f32 %v588, %v604
  %v608 = vmul.f32 %v606, 0.5
  %v609 = vmul.f32 %v607, 0.5
  %v610 = vtanh.pop %v608
  %v611 = vtanh.pop %v609
  %v612 = vadd.f32 %v610, 1.0
  %v613 = vadd.f32 %v611, 1.0
  %v614 = vmul.f32 %v612, 0.5
  %v615 = vmul.f32 %v613, 0.5
  %v616 = vtanh.pop %v606
  %v617 = vtanh.pop %v607
  %v618 = vmul.f32 %v614, %v540
  %v619 = vmul.f32 %v615, %v541
  %622 = vrot.lane.b32.xlu0 %v616, 32
  %v623 = vpop.permute.xlu0 %622
  %624 = vrot.lane.b32.xlu0 %v617, 32
  %v625 = vpop.permute.xlu0 %624
  %v628 = vmul.f32 %v614, %v623
  %v629 = vmul.f32 %v615, %v625
  %632 = vrot.lane.b32.xlu0 %v628, 32
  %v633 = vpop.permute.xlu0 %632
  %634 = vrot.lane.b32.xlu0 %v629, 32
  %v635 = vpop.permute.xlu0 %634
  %v638 = vadd.f32 %v618, %v633
  %v639 = vadd.f32 %v619, %v635
  %v640 = vtanh.pop %v638
  %v641 = vtanh.pop %v639
  %644 = vrot.lane.b32.xlu0 %v640, 32
  %v645 = vpop.permute.xlu0 %644
  %646 = vrot.lane.b32.xlu0 %v641, 32
  %v647 = vpop.permute.xlu0 %646
  %v650 = vmul.f32 %v614, %v645
  %v651 = vmul.f32 %v615, %v647
  %653 = vrot.lane.b32.xlu0 %v650, 64
  %v654 = vpop.permute.xlu0 %653
  %s656 = scalar_lea.vmem %s5, 24
  %657 = vst.msk [vmem:[%s656] sm:$0xff] %vm359, %v654
  %659 = vrot.lane.b32.xlu0 %v651, 96
  %v660 = vpop.permute.xlu0 %659
  %s662 = scalar_lea.vmem %s5, 32
  %663 = vst.msk [vmem:[%s662] sm:$0xff] %vm366, %v660
  %v664 = vpack.c.bf16 %v650, %v650
  %v665 = vpack.c.bf16 %v651, %v651
  %v668 = vunpack.c.l.b16 %v664
  %v669 = vunpack.c.l.b16 %v665
  %v670 = vpack.c.b16 %v669, %v668
  %671 = vrot.lane.b32.xlu0 %v670, 64
  %v672 = vpop.permute.xlu0 %671
  %673 = vrot.lane.b32.xlu0 %v670, 96
  %v674 = vpop.permute.xlu0 %673
  %v677 = vsel %vm359, %v672, %v674
  %v679 = vunpack.c.l.bf16 %v677
  %v680 = vunpack.c.h.bf16 %v677
  %v681 = vmul.f32 %v679, %v385
  %v682 = vmul.f32 %v680, %v386
  %v683 = vpack.c.bf16 %v682, %v681
  %s684 = scalar_lea.vmem [#allocation2], 64
  %v685 = vld [vmem:[%s684] sm:$0xff]
  %v686 = vld [vmem:[%s684 + $0x8] sm:$0xff]
  %v688 = vsel %vm291, %v683, 0
  %690 = vmatpush.bf16.msra.mxu0 0
  %691 = vmatpush.bf16.msra.mxu0 0
  %692 = vmatpush.bf16.msra.mxu0 0
  %693 = vmatpush.bf16.msra.mxu0 0
  %694 = vmatpush.bf16.msra.mxu0 %v286
  %695 = vmatpush.bf16.msra.mxu0 %v285
  %696 = vmatpush.bf16.msra.mxu0 %v284
  %697 = vmatpush.bf16.msra.mxu0 %v283
  %698 = vmatmul.bf16.gmra.mxu0 %v688
  %v699 = vpop.f32.mrf.mxu0
  %v700 = vadd.f32 0.0, %v699
  %v701 = vpop.f32.mrf.mxu0
  %v702 = vadd.f32 0.0, %v701
  %703 = vdwg.mxu0
  %v704 = vadd.f32 %v685, %v700
  %v705 = vadd.f32 %v686, %v702
  %v706 = vmul.f32 %v704, 0.5
  %v707 = vmul.f32 %v705, 0.5
  %v708 = vtanh.pop %v706
  %v709 = vtanh.pop %v707
  %v710 = vadd.f32 %v708, 1.0
  %v711 = vadd.f32 %v709, 1.0
  %v712 = vmul.f32 %v710, 0.5
  %v713 = vmul.f32 %v711, 0.5
  %v714 = vtanh.pop %v704
  %v715 = vtanh.pop %v705
  %v716 = vmul.f32 %v712, %v638
  %v717 = vmul.f32 %v713, %v639
  %720 = vrot.lane.b32.xlu0 %v714, 32
  %v721 = vpop.permute.xlu0 %720
  %722 = vrot.lane.b32.xlu0 %v715, 32
  %v723 = vpop.permute.xlu0 %722
  %v726 = vmul.f32 %v712, %v721
  %v727 = vmul.f32 %v713, %v723
  %730 = vrot.lane.b32.xlu0 %v726, 32
  %v731 = vpop.permute.xlu0 %730
  %732 = vrot.lane.b32.xlu0 %v727, 32
  %v733 = vpop.permute.xlu0 %732
  %v736 = vadd.f32 %v716, %v731
  %v737 = vadd.f32 %v717, %v733
  %v738 = vtanh.pop %v736
  %v739 = vtanh.pop %v737
  %742 = vrot.lane.b32.xlu0 %v738, 32
  %v743 = vpop.permute.xlu0 %742
  %744 = vrot.lane.b32.xlu0 %v739, 32
  %v745 = vpop.permute.xlu0 %744
  %v748 = vmul.f32 %v712, %v743
  %v749 = vmul.f32 %v713, %v745
  %751 = vrot.lane.b32.xlu0 %v748, 64
  %v752 = vpop.permute.xlu0 %751
  %754 = vst.msk [vmem:[%s662] sm:$0xff] %vm359, %v752
  %756 = vrot.lane.b32.xlu0 %v749, 96
  %v757 = vpop.permute.xlu0 %756
  %759 = vst.msk [vmem:[%s656] sm:$0xff] %vm366, %v757
  %v760 = vpack.c.bf16 %v748, %v748
  %v761 = vpack.c.bf16 %v749, %v749
  %v764 = vunpack.c.l.b16 %v760
  %v765 = vunpack.c.l.b16 %v761
  %v766 = vpack.c.b16 %v765, %v764
  %767 = vrot.lane.b32.xlu0 %v766, 64
  %v768 = vpop.permute.xlu0 %767
  %769 = vrot.lane.b32.xlu0 %v766, 96
  %v770 = vpop.permute.xlu0 %769
  %v773 = vsel %vm359, %v768, %v770
  %v775 = vunpack.c.l.bf16 %v773
  %v776 = vunpack.c.h.bf16 %v773
  %v777 = vmul.f32 %v775, %v385
  %v778 = vmul.f32 %v776, %v386
  %v779 = vpack.c.bf16 %v778, %v777
  %s780 = scalar_lea.vmem [#allocation2], 80
  %v781 = vld [vmem:[%s780] sm:$0xff]
  %v782 = vld [vmem:[%s780 + $0x8] sm:$0xff]
  %v784 = vsel %vm291, %v779, 0
  %786 = vmatpush.bf16.msra.mxu0 0
  %787 = vmatpush.bf16.msra.mxu0 0
  %788 = vmatpush.bf16.msra.mxu0 0
  %789 = vmatpush.bf16.msra.mxu0 0
  %790 = vmatpush.bf16.msra.mxu0 %v286
  %791 = vmatpush.bf16.msra.mxu0 %v285
  %792 = vmatpush.bf16.msra.mxu0 %v284
  %793 = vmatpush.bf16.msra.mxu0 %v283
  %794 = vmatmul.bf16.gmra.mxu0 %v784
  %v795 = vpop.f32.mrf.mxu0
  %v796 = vadd.f32 0.0, %v795
  %v797 = vpop.f32.mrf.mxu0
  %v798 = vadd.f32 0.0, %v797
  %799 = vdwg.mxu0
  %v800 = vadd.f32 %v781, %v796
  %v801 = vadd.f32 %v782, %v798
  %v802 = vmul.f32 %v800, 0.5
  %v803 = vmul.f32 %v801, 0.5
  %v804 = vtanh.pop %v802
  %v805 = vtanh.pop %v803
  %v806 = vadd.f32 %v804, 1.0
  %v807 = vadd.f32 %v805, 1.0
  %v808 = vmul.f32 %v806, 0.5
  %v809 = vmul.f32 %v807, 0.5
  %v810 = vtanh.pop %v800
  %v811 = vtanh.pop %v801
  %v812 = vmul.f32 %v808, %v736
  %v813 = vmul.f32 %v809, %v737
  %816 = vrot.lane.b32.xlu0 %v810, 32
  %v817 = vpop.permute.xlu0 %816
  %818 = vrot.lane.b32.xlu0 %v811, 32
  %v819 = vpop.permute.xlu0 %818
  %v822 = vmul.f32 %v808, %v817
  %v823 = vmul.f32 %v809, %v819
  %826 = vrot.lane.b32.xlu0 %v822, 32
  %v827 = vpop.permute.xlu0 %826
  %828 = vrot.lane.b32.xlu0 %v823, 32
  %v829 = vpop.permute.xlu0 %828
  %v832 = vadd.f32 %v812, %v827
  %v833 = vadd.f32 %v813, %v829
  %v834 = vtanh.pop %v832
  %v835 = vtanh.pop %v833
  %838 = vrot.lane.b32.xlu0 %v834, 32
  %v839 = vpop.permute.xlu0 %838
  %840 = vrot.lane.b32.xlu0 %v835, 32
  %v841 = vpop.permute.xlu0 %840
  %v844 = vmul.f32 %v808, %v839
  %v845 = vmul.f32 %v809, %v841
  %847 = vrot.lane.b32.xlu0 %v844, 64
  %v848 = vpop.permute.xlu0 %847
  %850 = vst.msk [vmem:[%s564] sm:$0xff] %vm359, %v848
  %852 = vrot.lane.b32.xlu0 %v845, 96
  %v853 = vpop.permute.xlu0 %852
  %855 = vst.msk [vmem:[%s558] sm:$0xff] %vm366, %v853
  %v856 = vpack.c.bf16 %v844, %v844
  %v857 = vpack.c.bf16 %v845, %v845
  %v860 = vunpack.c.l.b16 %v856
  %v861 = vunpack.c.l.b16 %v857
  %v862 = vpack.c.b16 %v861, %v860
  %863 = vrot.lane.b32.xlu0 %v862, 64
  %v864 = vpop.permute.xlu0 %863
  %865 = vrot.lane.b32.xlu0 %v862, 96
  %v866 = vpop.permute.xlu0 %865
  %v869 = vsel %vm359, %v864, %v866
  %v871 = vunpack.c.l.bf16 %v869
  %v872 = vunpack.c.h.bf16 %v869
  %v873 = vmul.f32 %v871, %v385
  %v874 = vmul.f32 %v872, %v386
  %v875 = vpack.c.bf16 %v874, %v873
  %s876 = scalar_lea.vmem [#allocation2], 96
  %v877 = vld [vmem:[%s876] sm:$0xff]
  %v878 = vld [vmem:[%s876 + $0x8] sm:$0xff]
  %v880 = vsel %vm291, %v875, 0
  %882 = vmatpush.bf16.msra.mxu0 0
  %883 = vmatpush.bf16.msra.mxu0 0
  %884 = vmatpush.bf16.msra.mxu0 0
  %885 = vmatpush.bf16.msra.mxu0 0
  %886 = vmatpush.bf16.msra.mxu0 %v286
  %887 = vmatpush.bf16.msra.mxu0 %v285
  %888 = vmatpush.bf16.msra.mxu0 %v284
  %889 = vmatpush.bf16.msra.mxu0 %v283
  %890 = vmatmul.bf16.gmra.mxu0 %v880
  %v891 = vpop.f32.mrf.mxu0
  %v892 = vadd.f32 0.0, %v891
  %v893 = vpop.f32.mrf.mxu0
  %v894 = vadd.f32 0.0, %v893
  %895 = vdwg.mxu0
  %v896 = vadd.f32 %v877, %v892
  %v897 = vadd.f32 %v878, %v894
  %v898 = vmul.f32 %v896, 0.5
  %v899 = vmul.f32 %v897, 0.5
  %v900 = vtanh.pop %v898
  %v901 = vtanh.pop %v899
  %v902 = vadd.f32 %v900, 1.0
  %v903 = vadd.f32 %v901, 1.0
  %v904 = vmul.f32 %v902, 0.5
  %v905 = vmul.f32 %v903, 0.5
  %v906 = vtanh.pop %v896
  %v907 = vtanh.pop %v897
  %v908 = vmul.f32 %v904, %v832
  %v909 = vmul.f32 %v905, %v833
  %912 = vrot.lane.b32.xlu0 %v906, 32
  %v913 = vpop.permute.xlu0 %912
  %914 = vrot.lane.b32.xlu0 %v907, 32
  %v915 = vpop.permute.xlu0 %914
  %v918 = vmul.f32 %v904, %v913
  %v919 = vmul.f32 %v905, %v915
  %922 = vrot.lane.b32.xlu0 %v918, 32
  %v923 = vpop.permute.xlu0 %922
  %924 = vrot.lane.b32.xlu0 %v919, 32
  %v925 = vpop.permute.xlu0 %924
  %v928 = vadd.f32 %v908, %v923
  %v929 = vadd.f32 %v909, %v925
  %v930 = vtanh.pop %v928
  %v931 = vtanh.pop %v929
  %934 = vrot.lane.b32.xlu0 %v930, 32
  %v935 = vpop.permute.xlu0 %934
  %936 = vrot.lane.b32.xlu0 %v931, 32
  %v937 = vpop.permute.xlu0 %936
  %v940 = vmul.f32 %v904, %v935
  %v941 = vmul.f32 %v905, %v937
  %943 = vrot.lane.b32.xlu0 %v940, 64
  %v944 = vpop.permute.xlu0 %943
  %946 = vst.msk [vmem:[%s466] sm:$0xff] %vm359, %v944
  %948 = vrot.lane.b32.xlu0 %v941, 96
  %v949 = vpop.permute.xlu0 %948
  %951 = vst.msk [vmem:[%s460] sm:$0xff] %vm366, %v949
  %v952 = vpack.c.bf16 %v940, %v940
  %v953 = vpack.c.bf16 %v941, %v941
  %v956 = vunpack.c.l.b16 %v952
  %v957 = vunpack.c.l.b16 %v953
  %v958 = vpack.c.b16 %v957, %v956
  %959 = vrot.lane.b32.xlu0 %v958, 64
  %v960 = vpop.permute.xlu0 %959
  %961 = vrot.lane.b32.xlu0 %v958, 96
  %v962 = vpop.permute.xlu0 %961
  %v965 = vsel %vm359, %v960, %v962
  %v967 = vunpack.c.l.bf16 %v965
  %v968 = vunpack.c.h.bf16 %v965
  %v969 = vmul.f32 %v967, %v385
  %v970 = vmul.f32 %v968, %v386
  %v971 = vpack.c.bf16 %v970, %v969
  %s972 = scalar_lea.vmem [#allocation2], 112
  %v973 = vld [vmem:[%s972] sm:$0xff]
  %v974 = vld [vmem:[%s972 + $0x8] sm:$0xff]
  %v976 = vsel %vm291, %v971, 0
  %978 = vmatpush.bf16.msra.mxu0 0
  %979 = vmatpush.bf16.msra.mxu0 0
  %980 = vmatpush.bf16.msra.mxu0 0
  %981 = vmatpush.bf16.msra.mxu0 0
  %982 = vmatpush.bf16.msra.mxu0 %v286
  %983 = vmatpush.bf16.msra.mxu0 %v285
  %984 = vmatpush.bf16.msra.mxu0 %v284
  %985 = vmatpush.bf16.msra.mxu0 %v283
  %986 = vmatmul.bf16.gmra.mxu0 %v976
  %v987 = vpop.f32.mrf.mxu0
  %v988 = vadd.f32 0.0, %v987
  %v989 = vpop.f32.mrf.mxu0
  %v990 = vadd.f32 0.0, %v989
  %991 = vdwg.mxu0
  %v992 = vadd.f32 %v973, %v988
  %v993 = vadd.f32 %v974, %v990
  %v994 = vmul.f32 %v992, 0.5
  %v995 = vmul.f32 %v993, 0.5
  %v996 = vtanh.pop %v994
  %v997 = vtanh.pop %v995
  %v998 = vadd.f32 %v996, 1.0
  %v999 = vadd.f32 %v997, 1.0
  %v1000 = vmul.f32 %v998, 0.5
  %v1001 = vmul.f32 %v999, 0.5
  %v1002 = vtanh.pop %v992
  %v1003 = vtanh.pop %v993
  %v1004 = vmul.f32 %v1000, %v928
  %v1005 = vmul.f32 %v1001, %v929
  %1008 = vrot.lane.b32.xlu0 %v1002, 32
  %v1009 = vpop.permute.xlu0 %1008
  %1010 = vrot.lane.b32.xlu0 %v1003, 32
  %v1011 = vpop.permute.xlu0 %1010
  %v1014 = vmul.f32 %v1000, %v1009
  %v1015 = vmul.f32 %v1001, %v1011
  %1018 = vrot.lane.b32.xlu0 %v1014, 32
  %v1019 = vpop.permute.xlu0 %1018
  %1020 = vrot.lane.b32.xlu0 %v1015, 32
  %v1021 = vpop.permute.xlu0 %1020
  %v1024 = vadd.f32 %v1004, %v1019
  %v1025 = vadd.f32 %v1005, %v1021
  %v1026 = vtanh.pop %v1024
  %v1027 = vtanh.pop %v1025
  %1030 = vrot.lane.b32.xlu0 %v1026, 32
  %v1031 = vpop.permute.xlu0 %1030
  %1032 = vrot.lane.b32.xlu0 %v1027, 32
  %v1033 = vpop.permute.xlu0 %1032
  %v1036 = vmul.f32 %v1000, %v1031
  %v1037 = vmul.f32 %v1001, %v1033
  %1039 = vrot.lane.b32.xlu0 %v1036, 64
  %v1040 = vpop.permute.xlu0 %1039
  %1042 = vst.msk [vmem:[%s365] sm:$0xff] %vm359, %v1040
  %1044 = vrot.lane.b32.xlu0 %v1037, 96
  %v1045 = vpop.permute.xlu0 %1044
  %1047 = vst.msk [vmem:[%s5] sm:$0xff] %vm366, %v1045
  // Predicated region
  $region22: #{mlstm_forward.1} parent=0 // pred_check
    _
  $region23: #{mlstm_forward.1} parent=0 // pred_check_branch
    %1049 = sbr.rel (0) target = $region25
  $region24: #{mlstm_forward.1} parent=0 // pred_region
    _
  $region25: #{mlstm_forward.1} parent=0 // pred_fallthru
    _
  // Predicated region
  $region26: #{mlstm_forward.1} parent=0 // pred_check
    _
  $region27: #{mlstm_forward.1} parent=0 // pred_check_branch
    %1051 = sbr.rel (0) target = $region29
  $region28: #{mlstm_forward.1} parent=0 // pred_region
    _
  $region29: #{mlstm_forward.1} parent=0 // pred_fallthru
    _

</llo_original>
